<compile_context>
chip_gen: v7x
topology: tpu7x:2x2x1
jax: 0.10.0
libtpu: 0.0.40
codegen_flags: <defaults>
</compile_context>

<pallas_src>
import math

import jax
import jax.numpy as jnp
from jax import lax
from jax.experimental import pallas as pl
from jax.experimental.pallas import tpu as pltpu

# Small stand-in for the real module config (d_model=1024, n_head=16).
D_MODEL = 32
N_HEAD = 4
D_K = D_MODEL // N_HEAD


# ----------------------------- kernel factory ---------------------------------
def _make_kernel(bt, sq, sk, n_head, d_k, has_mask):
    """Builds the fused kernel for a (bt batches)-per-step block."""
    scale = 1.0 / math.sqrt(d_k)

    def kernel(*refs):
        if has_mask:
            (q_ref, k_ref, v_ref, mask_ref,
             wq_ref, bq_ref, wk_ref, bk_ref, wv_ref, bv_ref, wo_ref, bo_ref,
             o_ref) = refs
        else:
            (q_ref, k_ref, v_ref,
             wq_ref, bq_ref, wk_ref, bk_ref, wv_ref, bv_ref, wo_ref, bo_ref,
             o_ref) = refs
            mask_ref = None

        # Q/K/V projections: three tall MXU matmuls over all folded batches,
        # f32 accumulation.  Weights are pre-transposed (D_in, D_out) so no
        # in-kernel transpose is needed.
        q = jnp.dot(q_ref[...], wq_ref[...],
                    preferred_element_type=jnp.float32) + bq_ref[...]   # (bt*Sq, D)
        k = jnp.dot(k_ref[...], wk_ref[...],
                    preferred_element_type=jnp.float32) + bk_ref[...]   # (bt*Sk, D)
        v = jnp.dot(v_ref[...], wv_ref[...],
                    preferred_element_type=jnp.float32) + bv_ref[...]   # (bt*Sk, D)

        add_mask = mask_ref[...] if has_mask else None                  # (bt*Sq, Sk)

        ctx_rows = []
        for b in range(bt):                      # static unroll: folded batches
            qb = q[b * sq:(b + 1) * sq, :]       # sublane slices (multiples of 8)
            kb = k[b * sk:(b + 1) * sk, :]
            vb = v[b * sk:(b + 1) * sk, :]
            bias_b = add_mask[b * sq:(b + 1) * sq, :] if has_mask else None

            ctx_heads = []
            for h in range(n_head):              # static unroll: heads
                lo = h * d_k
                qh = qb[:, lo:lo + d_k]          # (Sq, Dk)
                kh = kb[:, lo:lo + d_k]          # (Sk, Dk)
                vh = vb[:, lo:lo + d_k]          # (Sk, Dk)

                # q @ k^T via dot_general contracting last dims (no transpose).
                s = lax.dot_general(qh, kh, (((1,), (1,)), ((), ())),
                                    preferred_element_type=jnp.float32) * scale
                if has_mask:
                    s = s + bias_b               # additive -1e9 where masked
                m = jnp.max(s, axis=-1, keepdims=True)
                p = jnp.exp(s - m)
                p = p / jnp.sum(p, axis=-1, keepdims=True)   # exact softmax
                ctx_heads.append(jnp.dot(p, vh,
                                         preferred_element_type=jnp.float32))
            # Lane-contiguous per-batch context (Sq, D): all heads merged.
            ctx_rows.append(jnp.concatenate(ctx_heads, axis=-1))

        ctx = ctx_rows[0] if bt == 1 else jnp.concatenate(ctx_rows, axis=0)

        # Single full-depth (K = d_model) output projection for all rows.
        out = jnp.dot(ctx, wo_ref[...],
                      preferred_element_type=jnp.float32) + bo_ref[...]
        o_ref[...] = out.astype(o_ref.dtype)

    return kernel


# --------------------------- parameter preparation ----------------------------
def prepare_params(params, weight_dtype=None):
    """One-time prep (hoisted out of the per-forward path): transpose the
    PyTorch (d_out, d_in) weights once, reshape biases to row vectors, and
    optionally cast weights (e.g. jnp.bfloat16 for v6e/v7x)."""
    def w(name):
        x = jnp.asarray(params[name]).T
        return x.astype(weight_dtype) if weight_dtype is not None else x

    def b(name):
        return jnp.asarray(params[name]).reshape(1, -1).astype(jnp.float32)

    return {"WqT": w("Wq"), "WkT": w("Wk"), "WvT": w("Wv"), "WoT": w("Wo"),
            "bq": b("bq"), "bk": b("bk"), "bv": b("bv"), "bo": b("bo")}


# -------------------------------- wrapper --------------------------------------
def cross_attention(query, key, value, prepared, attention_mask=None, *,
                    n_head=N_HEAD, block_batch=None, compute_dtype=None):
    """Fused forward: query (B,Sq,D), key/value (B,Sk,D) -> (B,Sq,D)."""
    B, Sq, D = query.shape
    Bk, Sk, Dk_in = key.shape
    assert value.shape == key.shape and Bk == B and Dk_in == D
    assert D % n_head == 0
    d_k = D // n_head

    # Choose how many batches to fold into one grid step (largest divisor of B
    # that keeps a modest row count and a (8,128)-friendly block).
    if block_batch is None:
        block_batch = 1
        for c in range(1, B + 1):
            if B % c == 0 and c * max(Sq, Sk) <= 512 and (
                    c == B or ((c * Sq) % 8 == 0 and (c * Sk) % 8 == 0)):
                block_batch = c
    bt = block_batch
    assert B % bt == 0, "block_batch must divide the batch size"

    # Flatten rows in the wrapper (contiguous, free) so the kernel blocks are
    # 2-D and the projections see M = bt*S rows.
    qf = query.reshape(B * Sq, D)
    kf = key.reshape(B * Sk, D)
    vf = value.reshape(B * Sk, D)
    wq, wk, wv, wo = (prepared[k_] for k_ in ("WqT", "WkT", "WvT", "WoT"))
    if compute_dtype is not None:          # bf16 feed for the MXU on v6e/v7x
        qf, kf, vf = (x.astype(compute_dtype) for x in (qf, kf, vf))
        wq, wk, wv, wo = (w.astype(compute_dtype) for w in (wq, wk, wv, wo))

    row_q, row_k = bt * Sq, bt * Sk
    has_mask = attention_mask is not None

    inputs = [qf, kf, vf]
    in_specs = [
        pl.BlockSpec((row_q, D), lambda i: (i, 0)),
        pl.BlockSpec((row_k, D), lambda i: (i, 0)),
        pl.BlockSpec((row_k, D), lambda i: (i, 0)),
    ]
    if has_mask:
        m = jnp.asarray(attention_mask)
        if m.ndim == 4:
            if m.shape[1] != 1:
                raise NotImplementedError(
                    "head-dependent attention masks are not supported")
            m = m[:, 0]
        m = jnp.broadcast_to(m.astype(bool), (B, Sq, Sk))
        add_mask = jnp.where(m, jnp.float32(-1e9),
                             jnp.float32(0.0)).reshape(B * Sq, Sk)
        inputs.append(add_mask)
        in_specs.append(pl.BlockSpec((row_q, Sk), lambda i: (i, 0)))

    const = lambda i: (0, 0)               # weights/biases resident across steps
    w_spec = pl.BlockSpec((D, D), const)
    b_spec = pl.BlockSpec((1, D), const)
    inputs += [wq, prepared["bq"], wk, prepared["bk"],
               wv, prepared["bv"], wo, prepared["bo"]]
    in_specs += [w_spec, b_spec, w_spec, b_spec, w_spec, b_spec, w_spec, b_spec]

    kernel = _make_kernel(bt, Sq, Sk, n_head, d_k, has_mask)

    out_flat = pl.pallas_call(
        kernel,
        out_shape=jax.ShapeDtypeStruct((B * Sq, D), query.dtype),
        grid_spec=pltpu.PrefetchScalarGridSpec(
            num_scalar_prefetch=0,
            grid=(B // bt,),                              # batch tiles
            in_specs=in_specs,
            out_specs=pl.BlockSpec((row_q, D), lambda i: (i, 0)),
        ),
        compiler_params=pltpu.CompilerParams(
            dimension_semantics=("parallel",),            # megacore on v7x
            vmem_limit_bytes=32 * 1024 * 1024,
        ),
    )(*inputs)
    return out_flat.reshape(B, Sq, D)


# ---------------------------- pure-JAX reference -------------------------------
def cross_attention_ref(query, key, value, params, attention_mask=None,
                        n_head=N_HEAD):
    B, Sq, D = query.shape
    Sk = key.shape[1]
    d_k = D // n_head
    lin = lambda x, w, b: x @ w.T + b
    q = lin(query, params["Wq"], params["bq"]).reshape(B, Sq, n_head, d_k).transpose(0, 2, 1, 3)
    k = lin(key, params["Wk"], params["bk"]).reshape(B, Sk, n_head, d_k).transpose(0, 2, 1, 3)
    v = lin(value, params["Wv"], params["bv"]).reshape(B, Sk, n_head, d_k).transpose(0, 2, 1, 3)
    s = jnp.einsum("bhqd,bhkd->bhqk", q, k) / math.sqrt(d_k)
    if attention_mask is not None:
        m = jnp.asarray(attention_mask)
        if m.ndim == 3:
            m = m[:, None]
        s = jnp.where(m, -1e9, s)
    p = jax.nn.softmax(s, axis=-1)
    o = jnp.einsum("bhqk,bhkd->bhqd", p, v).transpose(0, 2, 1, 3).reshape(B, Sq, D)
    return lin(o, params["Wo"], params["bo"])


# ----------------------------------- main ---------------------------------------
if __name__ == "__main__":
    root = jax.random.PRNGKey(0)
    keys = jax.random.split(root, 12)

    B, Sq, Sk = 2, 8, 8
    wscale = 1.0 / math.sqrt(D_MODEL)
    params = {
        "Wq": jax.random.normal(keys[0], (D_MODEL, D_MODEL), jnp.float32) * wscale,
        "bq": jax.random.normal(keys[1], (D_MODEL,), jnp.float32) * 0.01,
        "Wk": jax.random.normal(keys[2], (D_MODEL, D_MODEL), jnp.float32) * wscale,
        "bk": jax.random.normal(keys[3], (D_MODEL,), jnp.float32) * 0.01,
        "Wv": jax.random.normal(keys[4], (D_MODEL, D_MODEL), jnp.float32) * wscale,
        "bv": jax.random.normal(keys[5], (D_MODEL,), jnp.float32) * 0.01,
        "Wo": jax.random.normal(keys[6], (D_MODEL, D_MODEL), jnp.float32) * wscale,
        "bo": jax.random.normal(keys[7], (D_MODEL,), jnp.float32) * 0.01,
    }
    query = jax.random.normal(keys[8], (B, Sq, D_MODEL), jnp.float32)
    key_in = jax.random.normal(keys[9], (B, Sk, D_MODEL), jnp.float32)
    value = jax.random.normal(keys[10], (B, Sk, D_MODEL), jnp.float32)

    # One-time parameter prep (weight transposes hoisted out of the fwd path).
    prepared = prepare_params(params)

    # Tolerance covers MXU default-precision f32 matmul differences between the
    # Pallas kernel and the XLA reference (no algorithmic approximations left).
    ATOL = RTOL = 2e-3

    # 1) Unmasked forward (matches the module called with attention_mask=None).
    out = jax.block_until_ready(cross_attention(query, key_in, value, prepared))
    ref = cross_attention_ref(query, key_in, value, params)
    assert out.shape == (B, Sq, D_MODEL)
    assert jnp.allclose(out, ref, atol=ATOL, rtol=RTOL), "unmasked mismatch"

    # 2) Masked forward (key-padding mask, masked_fill(-1e9) semantics).
    lengths = jnp.array([Sk, 5])
    mask = (jnp.arange(Sk)[None, None, None, :] >=
            lengths[:, None, None, None])                     # (B, 1, 1, Sk)
    mask = jnp.broadcast_to(mask, (B, 1, Sq, Sk))
    out_m = jax.block_until_ready(
        cross_attention(query, key_in, value, prepared, attention_mask=mask))
    ref_m = cross_attention_ref(query, key_in, value, params, attention_mask=mask)
    assert jnp.allclose(out_m, ref_m, atol=ATOL, rtol=RTOL), "masked mismatch"

    print("KERNEL_OK")
</pallas_src>

<mosaic_0001>
module attributes {stable_mosaic.version = 11 : i64} {
  func.func @kernel(%arg0: i32, %arg1: memref<16x32xf32, #tpu.memory_space<vmem>>, %arg2: memref<16x32xf32, #tpu.memory_space<vmem>>, %arg3: memref<16x32xf32, #tpu.memory_space<vmem>>, %arg4: memref<32x32xf32, #tpu.memory_space<vmem>>, %arg5: memref<1x32xf32, #tpu.memory_space<vmem>>, %arg6: memref<32x32xf32, #tpu.memory_space<vmem>>, %arg7: memref<1x32xf32, #tpu.memory_space<vmem>>, %arg8: memref<32x32xf32, #tpu.memory_space<vmem>>, %arg9: memref<1x32xf32, #tpu.memory_space<vmem>>, %arg10: memref<32x32xf32, #tpu.memory_space<vmem>>, %arg11: memref<1x32xf32, #tpu.memory_space<vmem>>, %arg12: memref<16x32xf32, #tpu.memory_space<vmem>>) attributes {dimension_semantics = [#tpu.dimension_semantics<parallel>], iteration_bounds = array<i64: 1>, scalar_prefetch = 0 : i64, scratch_operands = 0 : i64, tpu.core_type = #tpu.core_type<tc>, window_params = [{transform_indices = @transform_0, window_bounds = array<i64: 16, 32>}, {transform_indices = @transform_1, window_bounds = array<i64: 16, 32>}, {transform_indices = @transform_2, window_bounds = array<i64: 16, 32>}, {pipeline_mode = #tpu.pipeline_mode<synchronous>, transform_indices = @transform_3, window_bounds = array<i64: 32, 32>}, {pipeline_mode = #tpu.pipeline_mode<synchronous>, transform_indices = @transform_4, window_bounds = array<i64: 1, 32>}, {pipeline_mode = #tpu.pipeline_mode<synchronous>, transform_indices = @transform_5, window_bounds = array<i64: 32, 32>}, {pipeline_mode = #tpu.pipeline_mode<synchronous>, transform_indices = @transform_6, window_bounds = array<i64: 1, 32>}, {pipeline_mode = #tpu.pipeline_mode<synchronous>, transform_indices = @transform_7, window_bounds = array<i64: 32, 32>}, {pipeline_mode = #tpu.pipeline_mode<synchronous>, transform_indices = @transform_8, window_bounds = array<i64: 1, 32>}, {pipeline_mode = #tpu.pipeline_mode<synchronous>, transform_indices = @transform_9, window_bounds = array<i64: 32, 32>}, {pipeline_mode = #tpu.pipeline_mode<synchronous>, transform_indices = @transform_10, window_bounds = array<i64: 1, 32>}, {transform_indices = @transform_11, window_bounds = array<i64: 16, 32>}]} {
    %c0 = arith.constant 0 : index
    %c0_0 = arith.constant 0 : index
    %0 = vector.load %arg1[%c0, %c0_0] : memref<16x32xf32, #tpu.memory_space<vmem>>, vector<16x32xf32>
    %c0_1 = arith.constant 0 : index
    %c0_2 = arith.constant 0 : index
    %1 = vector.load %arg4[%c0_1, %c0_2] : memref<32x32xf32, #tpu.memory_space<vmem>>, vector<32x32xf32>
    %cst = arith.constant dense<0.000000e+00> : vector<16x32xf32>
    %2 = tpu.matmul %0, %1, %cst {dimension_numbers = #tpu.dot_dimension_numbers<[1], [0], [0], [1], [0, 0, 1, 1], [], []>} : vector<16x32xf32>, vector<32x32xf32>, vector<16x32xf32> -> vector<16x32xf32>
    %c0_3 = arith.constant 0 : index
    %c0_4 = arith.constant 0 : index
    %3 = vector.load %arg5[%c0_3, %c0_4] : memref<1x32xf32, #tpu.memory_space<vmem>>, vector<1x32xf32>
    %4 = vector.broadcast %3 : vector<1x32xf32> to vector<16x32xf32>
    %5 = arith.addf %2, %4 : vector<16x32xf32>
    %c0_5 = arith.constant 0 : index
    %c0_6 = arith.constant 0 : index
    %6 = vector.load %arg2[%c0_5, %c0_6] : memref<16x32xf32, #tpu.memory_space<vmem>>, vector<16x32xf32>
    %c0_7 = arith.constant 0 : index
    %c0_8 = arith.constant 0 : index
    %7 = vector.load %arg6[%c0_7, %c0_8] : memref<32x32xf32, #tpu.memory_space<vmem>>, vector<32x32xf32>
    %cst_9 = arith.constant dense<0.000000e+00> : vector<16x32xf32>
    %8 = tpu.matmul %6, %7, %cst_9 {dimension_numbers = #tpu.dot_dimension_numbers<[1], [0], [0], [1], [0, 0, 1, 1], [], []>} : vector<16x32xf32>, vector<32x32xf32>, vector<16x32xf32> -> vector<16x32xf32>
    %c0_10 = arith.constant 0 : index
    %c0_11 = arith.constant 0 : index
    %9 = vector.load %arg7[%c0_10, %c0_11] : memref<1x32xf32, #tpu.memory_space<vmem>>, vector<1x32xf32>
    %10 = vector.broadcast %9 : vector<1x32xf32> to vector<16x32xf32>
    %11 = arith.addf %8, %10 : vector<16x32xf32>
    %c0_12 = arith.constant 0 : index
    %c0_13 = arith.constant 0 : index
    %12 = vector.load %arg3[%c0_12, %c0_13] : memref<16x32xf32, #tpu.memory_space<vmem>>, vector<16x32xf32>
    %c0_14 = arith.constant 0 : index
    %c0_15 = arith.constant 0 : index
    %13 = vector.load %arg8[%c0_14, %c0_15] : memref<32x32xf32, #tpu.memory_space<vmem>>, vector<32x32xf32>
    %cst_16 = arith.constant dense<0.000000e+00> : vector<16x32xf32>
    %14 = tpu.matmul %12, %13, %cst_16 {dimension_numbers = #tpu.dot_dimension_numbers<[1], [0], [0], [1], [0, 0, 1, 1], [], []>} : vector<16x32xf32>, vector<32x32xf32>, vector<16x32xf32> -> vector<16x32xf32>
    %c0_17 = arith.constant 0 : index
    %c0_18 = arith.constant 0 : index
    %15 = vector.load %arg9[%c0_17, %c0_18] : memref<1x32xf32, #tpu.memory_space<vmem>>, vector<1x32xf32>
    %16 = vector.broadcast %15 : vector<1x32xf32> to vector<16x32xf32>
    %17 = arith.addf %14, %16 : vector<16x32xf32>
    %18 = vector.extract_strided_slice %5 {offsets = [0, 0], sizes = [8, 32], strides = [1, 1]} : vector<16x32xf32> to vector<8x32xf32>
    %19 = vector.extract_strided_slice %11 {offsets = [0, 0], sizes = [8, 32], strides = [1, 1]} : vector<16x32xf32> to vector<8x32xf32>
    %20 = vector.extract_strided_slice %17 {offsets = [0, 0], sizes = [8, 32], strides = [1, 1]} : vector<16x32xf32> to vector<8x32xf32>
    %21 = vector.extract_strided_slice %18 {offsets = [0, 0], sizes = [8, 8], strides = [1, 1]} : vector<8x32xf32> to vector<8x8xf32>
    %22 = vector.extract_strided_slice %19 {offsets = [0, 0], sizes = [8, 8], strides = [1, 1]} : vector<8x32xf32> to vector<8x8xf32>
    %23 = vector.extract_strided_slice %20 {offsets = [0, 0], sizes = [8, 8], strides = [1, 1]} : vector<8x32xf32> to vector<8x8xf32>
    %cst_19 = arith.constant dense<0.000000e+00> : vector<8x8xf32>
    %24 = tpu.matmul %21, %22, %cst_19 {dimension_numbers = #tpu.dot_dimension_numbers<[1], [1], [0], [0], [0, 0, 1, 0], [], []>} : vector<8x8xf32>, vector<8x8xf32>, vector<8x8xf32> -> vector<8x8xf32>
    %cst_20 = arith.constant 0.353553385 : f32
    %25 = vector.broadcast %cst_20 : f32 to vector<8x8xf32>
    %26 = arith.mulf %24, %25 : vector<8x8xf32>
    %cst_21 = arith.constant dense<0xFF800000> : vector<8xf32>
    %27 = vector.multi_reduction <maximumf>, %26, %cst_21 [1] : vector<8x8xf32> to vector<8xf32>
    %28 = vector.shape_cast %27 : vector<8xf32> to vector<8x1xf32>
    %29 = vector.broadcast %28 : vector<8x1xf32> to vector<8x8xf32>
    %30 = arith.subf %26, %29 : vector<8x8xf32>
    %31 = math.exp %30 : vector<8x8xf32>
    %cst_22 = arith.constant dense<0.000000e+00> : vector<8xf32>
    %32 = vector.multi_reduction <add>, %31, %cst_22 [1] : vector<8x8xf32> to vector<8xf32>
    %33 = vector.shape_cast %32 : vector<8xf32> to vector<8x1xf32>
    %34 = vector.broadcast %33 : vector<8x1xf32> to vector<8x8xf32>
    %35 = arith.divf %31, %34 : vector<8x8xf32>
    %cst_23 = arith.constant dense<0.000000e+00> : vector<8x8xf32>
    %36 = tpu.matmul %35, %23, %cst_23 {dimension_numbers = #tpu.dot_dimension_numbers<[1], [0], [0], [1], [0, 0, 1, 1], [], []>} : vector<8x8xf32>, vector<8x8xf32>, vector<8x8xf32> -> vector<8x8xf32>
    %37 = vector.extract_strided_slice %18 {offsets = [0, 8], sizes = [8, 8], strides = [1, 1]} : vector<8x32xf32> to vector<8x8xf32>
    %38 = vector.extract_strided_slice %19 {offsets = [0, 8], sizes = [8, 8], strides = [1, 1]} : vector<8x32xf32> to vector<8x8xf32>
    %39 = vector.extract_strided_slice %20 {offsets = [0, 8], sizes = [8, 8], strides = [1, 1]} : vector<8x32xf32> to vector<8x8xf32>
    %cst_24 = arith.constant dense<0.000000e+00> : vector<8x8xf32>
    %40 = tpu.matmul %37, %38, %cst_24 {dimension_numbers = #tpu.dot_dimension_numbers<[1], [1], [0], [0], [0, 0, 1, 0], [], []>} : vector<8x8xf32>, vector<8x8xf32>, vector<8x8xf32> -> vector<8x8xf32>
    %cst_25 = arith.constant 0.353553385 : f32
    %41 = vector.broadcast %cst_25 : f32 to vector<8x8xf32>
    %42 = arith.mulf %40, %41 : vector<8x8xf32>
    %cst_26 = arith.constant dense<0xFF800000> : vector<8xf32>
    %43 = vector.multi_reduction <maximumf>, %42, %cst_26 [1] : vector<8x8xf32> to vector<8xf32>
    %44 = vector.shape_cast %43 : vector<8xf32> to vector<8x1xf32>
    %45 = vector.broadcast %44 : vector<8x1xf32> to vector<8x8xf32>
    %46 = arith.subf %42, %45 : vector<8x8xf32>
    %47 = math.exp %46 : vector<8x8xf32>
    %cst_27 = arith.constant dense<0.000000e+00> : vector<8xf32>
    %48 = vector.multi_reduction <add>, %47, %cst_27 [1] : vector<8x8xf32> to vector<8xf32>
    %49 = vector.shape_cast %48 : vector<8xf32> to vector<8x1xf32>
    %50 = vector.broadcast %49 : vector<8x1xf32> to vector<8x8xf32>
    %51 = arith.divf %47, %50 : vector<8x8xf32>
    %cst_28 = arith.constant dense<0.000000e+00> : vector<8x8xf32>
    %52 = tpu.matmul %51, %39, %cst_28 {dimension_numbers = #tpu.dot_dimension_numbers<[1], [0], [0], [1], [0, 0, 1, 1], [], []>} : vector<8x8xf32>, vector<8x8xf32>, vector<8x8xf32> -> vector<8x8xf32>
    %53 = vector.extract_strided_slice %18 {offsets = [0, 16], sizes = [8, 8], strides = [1, 1]} : vector<8x32xf32> to vector<8x8xf32>
    %54 = vector.extract_strided_slice %19 {offsets = [0, 16], sizes = [8, 8], strides = [1, 1]} : vector<8x32xf32> to vector<8x8xf32>
    %55 = vector.extract_strided_slice %20 {offsets = [0, 16], sizes = [8, 8], strides = [1, 1]} : vector<8x32xf32> to vector<8x8xf32>
    %cst_29 = arith.constant dense<0.000000e+00> : vector<8x8xf32>
    %56 = tpu.matmul %53, %54, %cst_29 {dimension_numbers = #tpu.dot_dimension_numbers<[1], [1], [0], [0], [0, 0, 1, 0], [], []>} : vector<8x8xf32>, vector<8x8xf32>, vector<8x8xf32> -> vector<8x8xf32>
    %cst_30 = arith.constant 0.353553385 : f32
    %57 = vector.broadcast %cst_30 : f32 to vector<8x8xf32>
    %58 = arith.mulf %56, %57 : vector<8x8xf32>
    %cst_31 = arith.constant dense<0xFF800000> : vector<8xf32>
    %59 = vector.multi_reduction <maximumf>, %58, %cst_31 [1] : vector<8x8xf32> to vector<8xf32>
    %60 = vector.shape_cast %59 : vector<8xf32> to vector<8x1xf32>
    %61 = vector.broadcast %60 : vector<8x1xf32> to vector<8x8xf32>
    %62 = arith.subf %58, %61 : vector<8x8xf32>
    %63 = math.exp %62 : vector<8x8xf32>
    %cst_32 = arith.constant dense<0.000000e+00> : vector<8xf32>
    %64 = vector.multi_reduction <add>, %63, %cst_32 [1] : vector<8x8xf32> to vector<8xf32>
    %65 = vector.shape_cast %64 : vector<8xf32> to vector<8x1xf32>
    %66 = vector.broadcast %65 : vector<8x1xf32> to vector<8x8xf32>
    %67 = arith.divf %63, %66 : vector<8x8xf32>
    %cst_33 = arith.constant dense<0.000000e+00> : vector<8x8xf32>
    %68 = tpu.matmul %67, %55, %cst_33 {dimension_numbers = #tpu.dot_dimension_numbers<[1], [0], [0], [1], [0, 0, 1, 1], [], []>} : vector<8x8xf32>, vector<8x8xf32>, vector<8x8xf32> -> vector<8x8xf32>
    %69 = vector.extract_strided_slice %18 {offsets = [0, 24], sizes = [8, 8], strides = [1, 1]} : vector<8x32xf32> to vector<8x8xf32>
    %70 = vector.extract_strided_slice %19 {offsets = [0, 24], sizes = [8, 8], strides = [1, 1]} : vector<8x32xf32> to vector<8x8xf32>
    %71 = vector.extract_strided_slice %20 {offsets = [0, 24], sizes = [8, 8], strides = [1, 1]} : vector<8x32xf32> to vector<8x8xf32>
    %cst_34 = arith.constant dense<0.000000e+00> : vector<8x8xf32>
    %72 = tpu.matmul %69, %70, %cst_34 {dimension_numbers = #tpu.dot_dimension_numbers<[1], [1], [0], [0], [0, 0, 1, 0], [], []>} : vector<8x8xf32>, vector<8x8xf32>, vector<8x8xf32> -> vector<8x8xf32>
    %cst_35 = arith.constant 0.353553385 : f32
    %73 = vector.broadcast %cst_35 : f32 to vector<8x8xf32>
    %74 = arith.mulf %72, %73 : vector<8x8xf32>
    %cst_36 = arith.constant dense<0xFF800000> : vector<8xf32>
    %75 = vector.multi_reduction <maximumf>, %74, %cst_36 [1] : vector<8x8xf32> to vector<8xf32>
    %76 = vector.shape_cast %75 : vector<8xf32> to vector<8x1xf32>
    %77 = vector.broadcast %76 : vector<8x1xf32> to vector<8x8xf32>
    %78 = arith.subf %74, %77 : vector<8x8xf32>
    %79 = math.exp %78 : vector<8x8xf32>
    %cst_37 = arith.constant dense<0.000000e+00> : vector<8xf32>
    %80 = vector.multi_reduction <add>, %79, %cst_37 [1] : vector<8x8xf32> to vector<8xf32>
    %81 = vector.shape_cast %80 : vector<8xf32> to vector<8x1xf32>
    %82 = vector.broadcast %81 : vector<8x1xf32> to vector<8x8xf32>
    %83 = arith.divf %79, %82 : vector<8x8xf32>
    %cst_38 = arith.constant dense<0.000000e+00> : vector<8x8xf32>
    %84 = tpu.matmul %83, %71, %cst_38 {dimension_numbers = #tpu.dot_dimension_numbers<[1], [0], [0], [1], [0, 0, 1, 1], [], []>} : vector<8x8xf32>, vector<8x8xf32>, vector<8x8xf32> -> vector<8x8xf32>
    %85 = tpu.concatenate %36, %52, %68, %84 in 1 : vector<8x8xf32>, vector<8x8xf32>, vector<8x8xf32>, vector<8x8xf32> -> vector<8x32xf32>
    %86 = vector.extract_strided_slice %5 {offsets = [8, 0], sizes = [8, 32], strides = [1, 1]} : vector<16x32xf32> to vector<8x32xf32>
    %87 = vector.extract_strided_slice %11 {offsets = [8, 0], sizes = [8, 32], strides = [1, 1]} : vector<16x32xf32> to vector<8x32xf32>
    %88 = vector.extract_strided_slice %17 {offsets = [8, 0], sizes = [8, 32], strides = [1, 1]} : vector<16x32xf32> to vector<8x32xf32>
    %89 = vector.extract_strided_slice %86 {offsets = [0, 0], sizes = [8, 8], strides = [1, 1]} : vector<8x32xf32> to vector<8x8xf32>
    %90 = vector.extract_strided_slice %87 {offsets = [0, 0], sizes = [8, 8], strides = [1, 1]} : vector<8x32xf32> to vector<8x8xf32>
    %91 = vector.extract_strided_slice %88 {offsets = [0, 0], sizes = [8, 8], strides = [1, 1]} : vector<8x32xf32> to vector<8x8xf32>
    %cst_39 = arith.constant dense<0.000000e+00> : vector<8x8xf32>
    %92 = tpu.matmul %89, %90, %cst_39 {dimension_numbers = #tpu.dot_dimension_numbers<[1], [1], [0], [0], [0, 0, 1, 0], [], []>} : vector<8x8xf32>, vector<8x8xf32>, vector<8x8xf32> -> vector<8x8xf32>
    %cst_40 = arith.constant 0.353553385 : f32
    %93 = vector.broadcast %cst_40 : f32 to vector<8x8xf32>
    %94 = arith.mulf %92, %93 : vector<8x8xf32>
    %cst_41 = arith.constant dense<0xFF800000> : vector<8xf32>
    %95 = vector.multi_reduction <maximumf>, %94, %cst_41 [1] : vector<8x8xf32> to vector<8xf32>
    %96 = vector.shape_cast %95 : vector<8xf32> to vector<8x1xf32>
    %97 = vector.broadcast %96 : vector<8x1xf32> to vector<8x8xf32>
    %98 = arith.subf %94, %97 : vector<8x8xf32>
    %99 = math.exp %98 : vector<8x8xf32>
    %cst_42 = arith.constant dense<0.000000e+00> : vector<8xf32>
    %100 = vector.multi_reduction <add>, %99, %cst_42 [1] : vector<8x8xf32> to vector<8xf32>
    %101 = vector.shape_cast %100 : vector<8xf32> to vector<8x1xf32>
    %102 = vector.broadcast %101 : vector<8x1xf32> to vector<8x8xf32>
    %103 = arith.divf %99, %102 : vector<8x8xf32>
    %cst_43 = arith.constant dense<0.000000e+00> : vector<8x8xf32>
    %104 = tpu.matmul %103, %91, %cst_43 {dimension_numbers = #tpu.dot_dimension_numbers<[1], [0], [0], [1], [0, 0, 1, 1], [], []>} : vector<8x8xf32>, vector<8x8xf32>, vector<8x8xf32> -> vector<8x8xf32>
    %105 = vector.extract_strided_slice %86 {offsets = [0, 8], sizes = [8, 8], strides = [1, 1]} : vector<8x32xf32> to vector<8x8xf32>
    %106 = vector.extract_strided_slice %87 {offsets = [0, 8], sizes = [8, 8], strides = [1, 1]} : vector<8x32xf32> to vector<8x8xf32>
    %107 = vector.extract_strided_slice %88 {offsets = [0, 8], sizes = [8, 8], strides = [1, 1]} : vector<8x32xf32> to vector<8x8xf32>
    %cst_44 = arith.constant dense<0.000000e+00> : vector<8x8xf32>
    %108 = tpu.matmul %105, %106, %cst_44 {dimension_numbers = #tpu.dot_dimension_numbers<[1], [1], [0], [0], [0, 0, 1, 0], [], []>} : vector<8x8xf32>, vector<8x8xf32>, vector<8x8xf32> -> vector<8x8xf32>
    %cst_45 = arith.constant 0.353553385 : f32
    %109 = vector.broadcast %cst_45 : f32 to vector<8x8xf32>
    %110 = arith.mulf %108, %109 : vector<8x8xf32>
    %cst_46 = arith.constant dense<0xFF800000> : vector<8xf32>
    %111 = vector.multi_reduction <maximumf>, %110, %cst_46 [1] : vector<8x8xf32> to vector<8xf32>
    %112 = vector.shape_cast %111 : vector<8xf32> to vector<8x1xf32>
    %113 = vector.broadcast %112 : vector<8x1xf32> to vector<8x8xf32>
    %114 = arith.subf %110, %113 : vector<8x8xf32>
    %115 = math.exp %114 : vector<8x8xf32>
    %cst_47 = arith.constant dense<0.000000e+00> : vector<8xf32>
    %116 = vector.multi_reduction <add>, %115, %cst_47 [1] : vector<8x8xf32> to vector<8xf32>
    %117 = vector.shape_cast %116 : vector<8xf32> to vector<8x1xf32>
    %118 = vector.broadcast %117 : vector<8x1xf32> to vector<8x8xf32>
    %119 = arith.divf %115, %118 : vector<8x8xf32>
    %cst_48 = arith.constant dense<0.000000e+00> : vector<8x8xf32>
    %120 = tpu.matmul %119, %107, %cst_48 {dimension_numbers = #tpu.dot_dimension_numbers<[1], [0], [0], [1], [0, 0, 1, 1], [], []>} : vector<8x8xf32>, vector<8x8xf32>, vector<8x8xf32> -> vector<8x8xf32>
    %121 = vector.extract_strided_slice %86 {offsets = [0, 16], sizes = [8, 8], strides = [1, 1]} : vector<8x32xf32> to vector<8x8xf32>
    %122 = vector.extract_strided_slice %87 {offsets = [0, 16], sizes = [8, 8], strides = [1, 1]} : vector<8x32xf32> to vector<8x8xf32>
    %123 = vector.extract_strided_slice %88 {offsets = [0, 16], sizes = [8, 8], strides = [1, 1]} : vector<8x32xf32> to vector<8x8xf32>
    %cst_49 = arith.constant dense<0.000000e+00> : vector<8x8xf32>
    %124 = tpu.matmul %121, %122, %cst_49 {dimension_numbers = #tpu.dot_dimension_numbers<[1], [1], [0], [0], [0, 0, 1, 0], [], []>} : vector<8x8xf32>, vector<8x8xf32>, vector<8x8xf32> -> vector<8x8xf32>
    %cst_50 = arith.constant 0.353553385 : f32
    %125 = vector.broadcast %cst_50 : f32 to vector<8x8xf32>
    %126 = arith.mulf %124, %125 : vector<8x8xf32>
    %cst_51 = arith.constant dense<0xFF800000> : vector<8xf32>
    %127 = vector.multi_reduction <maximumf>, %126, %cst_51 [1] : vector<8x8xf32> to vector<8xf32>
    %128 = vector.shape_cast %127 : vector<8xf32> to vector<8x1xf32>
    %129 = vector.broadcast %128 : vector<8x1xf32> to vector<8x8xf32>
    %130 = arith.subf %126, %129 : vector<8x8xf32>
    %131 = math.exp %130 : vector<8x8xf32>
    %cst_52 = arith.constant dense<0.000000e+00> : vector<8xf32>
    %132 = vector.multi_reduction <add>, %131, %cst_52 [1] : vector<8x8xf32> to vector<8xf32>
    %133 = vector.shape_cast %132 : vector<8xf32> to vector<8x1xf32>
    %134 = vector.broadcast %133 : vector<8x1xf32> to vector<8x8xf32>
    %135 = arith.divf %131, %134 : vector<8x8xf32>
    %cst_53 = arith.constant dense<0.000000e+00> : vector<8x8xf32>
    %136 = tpu.matmul %135, %123, %cst_53 {dimension_numbers = #tpu.dot_dimension_numbers<[1], [0], [0], [1], [0, 0, 1, 1], [], []>} : vector<8x8xf32>, vector<8x8xf32>, vector<8x8xf32> -> vector<8x8xf32>
    %137 = vector.extract_strided_slice %86 {offsets = [0, 24], sizes = [8, 8], strides = [1, 1]} : vector<8x32xf32> to vector<8x8xf32>
    %138 = vector.extract_strided_slice %87 {offsets = [0, 24], sizes = [8, 8], strides = [1, 1]} : vector<8x32xf32> to vector<8x8xf32>
    %139 = vector.extract_strided_slice %88 {offsets = [0, 24], sizes = [8, 8], strides = [1, 1]} : vector<8x32xf32> to vector<8x8xf32>
    %cst_54 = arith.constant dense<0.000000e+00> : vector<8x8xf32>
    %140 = tpu.matmul %137, %138, %cst_54 {dimension_numbers = #tpu.dot_dimension_numbers<[1], [1], [0], [0], [0, 0, 1, 0], [], []>} : vector<8x8xf32>, vector<8x8xf32>, vector<8x8xf32> -> vector<8x8xf32>
    %cst_55 = arith.constant 0.353553385 : f32
    %141 = vector.broadcast %cst_55 : f32 to vector<8x8xf32>
    %142 = arith.mulf %140, %141 : vector<8x8xf32>
    %cst_56 = arith.constant dense<0xFF800000> : vector<8xf32>
    %143 = vector.multi_reduction <maximumf>, %142, %cst_56 [1] : vector<8x8xf32> to vector<8xf32>
    %144 = vector.shape_cast %143 : vector<8xf32> to vector<8x1xf32>
    %145 = vector.broadcast %144 : vector<8x1xf32> to vector<8x8xf32>
    %146 = arith.subf %142, %145 : vector<8x8xf32>
    %147 = math.exp %146 : vector<8x8xf32>
    %cst_57 = arith.constant dense<0.000000e+00> : vector<8xf32>
    %148 = vector.multi_reduction <add>, %147, %cst_57 [1] : vector<8x8xf32> to vector<8xf32>
    %149 = vector.shape_cast %148 : vector<8xf32> to vector<8x1xf32>
    %150 = vector.broadcast %149 : vector<8x1xf32> to vector<8x8xf32>
    %151 = arith.divf %147, %150 : vector<8x8xf32>
    %cst_58 = arith.constant dense<0.000000e+00> : vector<8x8xf32>
    %152 = tpu.matmul %151, %139, %cst_58 {dimension_numbers = #tpu.dot_dimension_numbers<[1], [0], [0], [1], [0, 0, 1, 1], [], []>} : vector<8x8xf32>, vector<8x8xf32>, vector<8x8xf32> -> vector<8x8xf32>
    %153 = tpu.concatenate %104, %120, %136, %152 in 1 : vector<8x8xf32>, vector<8x8xf32>, vector<8x8xf32>, vector<8x8xf32> -> vector<8x32xf32>
    %154 = tpu.concatenate %85, %153 in 0 : vector<8x32xf32>, vector<8x32xf32> -> vector<16x32xf32>
    %c0_59 = arith.constant 0 : index
    %c0_60 = arith.constant 0 : index
    %155 = vector.load %arg10[%c0_59, %c0_60] : memref<32x32xf32, #tpu.memory_space<vmem>>, vector<32x32xf32>
    %cst_61 = arith.constant dense<0.000000e+00> : vector<16x32xf32>
    %156 = tpu.matmul %154, %155, %cst_61 {dimension_numbers = #tpu.dot_dimension_numbers<[1], [0], [0], [1], [0, 0, 1, 1], [], []>} : vector<16x32xf32>, vector<32x32xf32>, vector<16x32xf32> -> vector<16x32xf32>
    %c0_62 = arith.constant 0 : index
    %c0_63 = arith.constant 0 : index
    %157 = vector.load %arg11[%c0_62, %c0_63] : memref<1x32xf32, #tpu.memory_space<vmem>>, vector<1x32xf32>
    %158 = vector.broadcast %157 : vector<1x32xf32> to vector<16x32xf32>
    %159 = arith.addf %156, %158 : vector<16x32xf32>
    %c0_64 = arith.constant 0 : index
    %c0_65 = arith.constant 0 : index
    %160 = vector.load %arg12[%c0_64, %c0_65] : memref<16x32xf32, #tpu.memory_space<vmem>>, vector<16x32xf32>
    tpu.vector_store %arg12[%c0_64, %c0_65], %159 {strides = array<i32>} : memref<16x32xf32, #tpu.memory_space<vmem>>, vector<16x32xf32>,
    return
  }
  func.func @transform_0(%arg0: i32) -> (i32, i32) {
    %c0_i32 = arith.constant 0 : i32
    %c0_i32_0 = arith.constant 0 : i32
    return %arg0, %c0_i32 : i32, i32
  }
  func.func @transform_1(%arg0: i32) -> (i32, i32) {
    %c0_i32 = arith.constant 0 : i32
    %c0_i32_0 = arith.constant 0 : i32
    return %arg0, %c0_i32 : i32, i32
  }
  func.func @transform_2(%arg0: i32) -> (i32, i32) {
    %c0_i32 = arith.constant 0 : i32
    %c0_i32_0 = arith.constant 0 : i32
    return %arg0, %c0_i32 : i32, i32
  }
  func.func @transform_3(%arg0: i32) -> (i32, i32) {
    %c0_i32 = arith.constant 0 : i32
    %c0_i32_0 = arith.constant 0 : i32
    %c0_i32_1 = arith.constant 0 : i32
    return %c0_i32, %c0_i32_0 : i32, i32
  }
  func.func @transform_4(%arg0: i32) -> (i32, i32) {
    %c0_i32 = arith.constant 0 : i32
    %c0_i32_0 = arith.constant 0 : i32
    %c0_i32_1 = arith.constant 0 : i32
    return %c0_i32, %c0_i32_0 : i32, i32
  }
  func.func @transform_5(%arg0: i32) -> (i32, i32) {
    %c0_i32 = arith.constant 0 : i32
    %c0_i32_0 = arith.constant 0 : i32
    %c0_i32_1 = arith.constant 0 : i32
    return %c0_i32, %c0_i32_0 : i32, i32
  }
  func.func @transform_6(%arg0: i32) -> (i32, i32) {
    %c0_i32 = arith.constant 0 : i32
    %c0_i32_0 = arith.constant 0 : i32
    %c0_i32_1 = arith.constant 0 : i32
    return %c0_i32, %c0_i32_0 : i32, i32
  }
  func.func @transform_7(%arg0: i32) -> (i32, i32) {
    %c0_i32 = arith.constant 0 : i32
    %c0_i32_0 = arith.constant 0 : i32
    %c0_i32_1 = arith.constant 0 : i32
    return %c0_i32, %c0_i32_0 : i32, i32
  }
  func.func @transform_8(%arg0: i32) -> (i32, i32) {
    %c0_i32 = arith.constant 0 : i32
    %c0_i32_0 = arith.constant 0 : i32
    %c0_i32_1 = arith.constant 0 : i32
    return %c0_i32, %c0_i32_0 : i32, i32
  }
  func.func @transform_9(%arg0: i32) -> (i32, i32) {
    %c0_i32 = arith.constant 0 : i32
    %c0_i32_0 = arith.constant 0 : i32
    %c0_i32_1 = arith.constant 0 : i32
    return %c0_i32, %c0_i32_0 : i32, i32
  }
  func.func @transform_10(%arg0: i32) -> (i32, i32) {
    %c0_i32 = arith.constant 0 : i32
    %c0_i32_0 = arith.constant 0 : i32
    %c0_i32_1 = arith.constant 0 : i32
    return %c0_i32, %c0_i32_0 : i32, i32
  }
  func.func @transform_11(%arg0: i32) -> (i32, i32) {
    %c0_i32 = arith.constant 0 : i32
    %c0_i32_0 = arith.constant 0 : i32
    return %arg0, %c0_i32 : i32, i32
  }
}

</mosaic_0001>

<llo_original>
// kernel: tpu_custom_call.1
$region0: #{tpu_custom_call.1}
  #allocation0 [shape = 'u32[]', space=smem, size = 0x4, offset = 0x4, fixed_abs, tag = 'smem constant byte address 0x4 - core index']
  #allocation1 [shape = 'u32[144,128]{1,0:T(1,128)}', space=vmem, size = 0x12000, scoped, tag = 'internal scratch']
  %s0 = inlined_call_operand.hbm [shape: f32[16,32], index: 0, kind: input, shape index: {}]
  %s1 = inlined_call_operand.hbm [shape: f32[16,32], index: 1, kind: input, shape index: {}]
  %s2 = inlined_call_operand.hbm [shape: f32[16,32], index: 2, kind: input, shape index: {}]
  %s3 = inlined_call_operand.hbm [shape: f32[32,32], index: 3, kind: input, shape index: {}]
  %s4 = inlined_call_operand.vmem [shape: f32[1,32], index: 4, kind: input, shape index: {}]
  %s5 = inlined_call_operand.hbm [shape: f32[32,32], index: 5, kind: input, shape index: {}]
  %s6 = inlined_call_operand.vmem [shape: f32[1,32], index: 6, kind: input, shape index: {}]
  %s7 = inlined_call_operand.hbm [shape: f32[32,32], index: 7, kind: input, shape index: {}]
  %s8 = inlined_call_operand.hbm [shape: f32[1,32], index: 8, kind: input, shape index: {}]
  %s9 = inlined_call_operand.vmem [shape: f32[32,32], index: 9, kind: input, shape index: {}]
  %s10 = inlined_call_operand.vmem [shape: f32[1,32], index: 10, kind: input, shape index: {}]
  %s11 = inlined_call_operand.hbm [shape: f32[16,32], index: 11, kind: output, shape index: {}]
  %s12 = sld [smem:[#allocation0]]
  $region82: #{tpu_custom_call.1} parent=0
    _
  %s14 = ssub.s32 1, %s12
  %s15 = scalar_select 0, %s14, %s12
  $region1: #{tpu_custom_call.1} parent=0
    #allocation2 [shape = 'u8[8192]{0}', space=vmem, size = 0x2000, scoped, tag = 'input window, operand 0, single buffered']
    #allocation3 [shape = 's32[1]{0}', space=sflag, size = 0x4, scoped, tag = 'scoped memory for tpu_custom_call.1']
    #allocation4 [shape = 's32[1]{0}', space=sflag, size = 0x4, scoped, tag = 'scoped memory for tpu_custom_call.1']
    #allocation5 [shape = 'u8[8192]{0}', space=vmem, size = 0x2000, scoped, tag = 'input window, operand 1, single buffered']
    #allocation6 [shape = 's32[1]{0}', space=sflag, size = 0x4, scoped, tag = 'scoped memory for tpu_custom_call.1']
    #allocation7 [shape = 'u8[8192]{0}', space=vmem, size = 0x2000, scoped, tag = 'input window, operand 2, single buffered']
    #allocation8 [shape = 'u8[16384]{0}', space=vmem, size = 0x4000, scoped, tag = 'input window, operand 3, single buffered']
    #allocation9 [shape = 's32[1]{0}', space=sflag, size = 0x4, scoped, tag = 'scoped memory for tpu_custom_call.1']
    #allocation10 [shape = 'u8[16384]{0}', space=vmem, size = 0x4000, scoped, tag = 'input window, operand 5, single buffered']
    #allocation11 [shape = 'u8[16384]{0}', space=vmem, size = 0x4000, scoped, tag = 'input window, operand 7, single buffered']
    #allocation12 [shape = 's32[1]{0}', space=sflag, size = 0x4, scoped, tag = 'scoped memory for tpu_custom_call.1']
    #allocation13 [shape = 'u8[512]{0}', space=vmem, size = 0x400, scoped, tag = 'input window, operand 8, single buffered']
    #allocation14 [shape = 'u8[8192]{0}', space=vmem, size = 0x2000, scoped, tag = 'output window, operand 0, single buffered']
    %16 = vsyncpa [#allocation3], 0
    %17 = vsyncpa [#allocation6], 0
    %18 = vsyncpa [#allocation9], 0
    %19 = vsyncpa [#allocation12], 0
    %20 = vsyncpa [#allocation4], 0
    // Predicated region
    $region2: #{tpu_custom_call.1} parent=1 // pred_check
      _
    $region3: #{tpu_custom_call.1} parent=1 // pred_check_branch
      %22 = sbr.rel (0) target = $region5
    $region4: #{tpu_custom_call.1} parent=1 // pred_region
      %s24 = ssub.s32 256, 256
      %25 = vsyncadd [#allocation3], %s24
      %s26 = sshll.u32 [#allocation2], 4
      %s27 = int_to_ptr.vmem [resolvable:$true] %s26
      %32 = dma.hbm_to_vmem [thread:$0]  %s0, 256, %s27, [#allocation3], 128, 128, 8
    $region5: #{tpu_custom_call.1} parent=1 // pred_fallthru
      _
    // Predicated region
    $region6: #{tpu_custom_call.1} parent=1 // pred_check
      _
    $region7: #{tpu_custom_call.1} parent=1 // pred_check_branch
      %34 = sbr.rel (0) target = $region9
    $region8: #{tpu_custom_call.1} parent=1 // pred_region
      %s36 = ssub.s32 256, 256
      %37 = vsyncadd [#allocation6], %s36
      %s38 = sshll.u32 [#allocation5], 4
      %s39 = int_to_ptr.vmem [resolvable:$true] %s38
      %44 = dma.hbm_to_vmem [thread:$0]  %s1, 256, %s39, [#allocation6], 128, 128, 8
    $region9: #{tpu_custom_call.1} parent=1 // pred_fallthru
      _
    // Predicated region
    $region10: #{tpu_custom_call.1} parent=1 // pred_check
      _
    $region11: #{tpu_custom_call.1} parent=1 // pred_check_branch
      %46 = sbr.rel (0) target = $region13
    $region12: #{tpu_custom_call.1} parent=1 // pred_region
      %s48 = ssub.s32 256, 256
      %49 = vsyncadd [#allocation6], %s48
      %s50 = sshll.u32 [#allocation7], 4
      %s51 = int_to_ptr.vmem [resolvable:$true] %s50
      %56 = dma.hbm_to_vmem [thread:$0]  %s2, 256, %s51, [#allocation6], 128, 128, 8
    $region13: #{tpu_custom_call.1} parent=1 // pred_fallthru
      _
    // Predicated region
    $region14: #{tpu_custom_call.1} parent=1 // pred_check
      _
    $region15: #{tpu_custom_call.1} parent=1 // pred_check_branch
      %58 = sbr.rel (0) target = $region17
    $region16: #{tpu_custom_call.1} parent=1 // pred_region
      %s60 = ssub.s32 512, 512
      %61 = vsyncadd [#allocation9], %s60
      %s62 = sshll.u32 [#allocation8], 4
      %s63 = int_to_ptr.vmem [resolvable:$true] %s62
      %68 = dma.hbm_to_vmem [thread:$0]  %s3, 512, %s63, [#allocation9], 128, 128, 8
    $region17: #{tpu_custom_call.1} parent=1 // pred_fallthru
      _
    // Predicated region
    $region18: #{tpu_custom_call.1} parent=1 // pred_check
      _
    $region19: #{tpu_custom_call.1} parent=1 // pred_check_branch
      %70 = sbr.rel (0) target = $region21
    $region20: #{tpu_custom_call.1} parent=1 // pred_region
      _
    $region21: #{tpu_custom_call.1} parent=1 // pred_fallthru
      _
    // Predicated region
    $region22: #{tpu_custom_call.1} parent=1 // pred_check
      _
    $region23: #{tpu_custom_call.1} parent=1 // pred_check_branch
      %72 = sbr.rel (0) target = $region25
    $region24: #{tpu_custom_call.1} parent=1 // pred_region
      %s74 = ssub.s32 512, 512
      %75 = vsyncadd [#allocation9], %s74
      %s76 = sshll.u32 [#allocation10], 4
      %s77 = int_to_ptr.vmem [resolvable:$true] %s76
      %82 = dma.hbm_to_vmem [thread:$0]  %s5, 512, %s77, [#allocation9], 128, 128, 8
    $region25: #{tpu_custom_call.1} parent=1 // pred_fallthru
      _
    // Predicated region
    $region26: #{tpu_custom_call.1} parent=1 // pred_check
      _
    $region27: #{tpu_custom_call.1} parent=1 // pred_check_branch
      %84 = sbr.rel (0) target = $region29
    $region28: #{tpu_custom_call.1} parent=1 // pred_region
      _
    $region29: #{tpu_custom_call.1} parent=1 // pred_fallthru
      _
    // Predicated region
    $region30: #{tpu_custom_call.1} parent=1 // pred_check
      _
    $region31: #{tpu_custom_call.1} parent=1 // pred_check_branch
      %86 = sbr.rel (0) target = $region33
    $region32: #{tpu_custom_call.1} parent=1 // pred_region
      %s88 = ssub.s32 512, 512
      %89 = vsyncadd [#allocation12], %s88
      %s90 = sshll.u32 [#allocation11], 4
      %s91 = int_to_ptr.vmem [resolvable:$true] %s90
      %96 = dma.hbm_to_vmem [thread:$0]  %s7, 512, %s91, [#allocation12], 128, 128, 8
    $region33: #{tpu_custom_call.1} parent=1 // pred_fallthru
      _
    // Predicated region
    $region34: #{tpu_custom_call.1} parent=1 // pred_check
      _
    $region35: #{tpu_custom_call.1} parent=1 // pred_check_branch
      %98 = sbr.rel (0) target = $region37
    $region36: #{tpu_custom_call.1} parent=1 // pred_region
      %s100 = ssub.s32 16, 16
      %101 = vsyncadd [#allocation12], %s100
      %s103 = sshll.u32 [#allocation13], 4
      %s104 = int_to_ptr.vmem [resolvable:$true] %s103
      %106 = dma.hbm_to_vmem [thread:$0]  %s8, 16, %s104, [#allocation12]
    $region37: #{tpu_custom_call.1} parent=1 // pred_fallthru
      _
    // Predicated region
    $region38: #{tpu_custom_call.1} parent=1 // pred_check
      _
    $region39: #{tpu_custom_call.1} parent=1 // pred_check_branch
      %108 = sbr.rel (0) target = $region41
    $region40: #{tpu_custom_call.1} parent=1 // pred_region
      _
    $region41: #{tpu_custom_call.1} parent=1 // pred_fallthru
      _
    // Predicated region
    $region42: #{tpu_custom_call.1} parent=1 // pred_check
      _
    $region43: #{tpu_custom_call.1} parent=1 // pred_check_branch
      %110 = sbr.rel (0) target = $region45
    $region44: #{tpu_custom_call.1} parent=1 // pred_region
      _
    $region45: #{tpu_custom_call.1} parent=1 // pred_fallthru
      _
    // Predicated region
    $region46: #{tpu_custom_call.1} parent=1 // pred_check
      _
    $region47: #{tpu_custom_call.1} parent=1 // pred_check_branch
      %112 = sbr.rel (0) target = $region49
    $region48: #{tpu_custom_call.1} parent=1 // pred_region
      %113 = dma.done [#allocation3], 256
    $region49: #{tpu_custom_call.1} parent=1 // pred_fallthru
      _
    // Predicated region
    $region50: #{tpu_custom_call.1} parent=1 // pred_check
      _
    $region51: #{tpu_custom_call.1} parent=1 // pred_check_branch
      %115 = sbr.rel (0) target = $region53
    $region52: #{tpu_custom_call.1} parent=1 // pred_region
      %116 = dma.done [#allocation6], 256
    $region53: #{tpu_custom_call.1} parent=1 // pred_fallthru
      _
    // Predicated region
    $region54: #{tpu_custom_call.1} parent=1 // pred_check
      _
    $region55: #{tpu_custom_call.1} parent=1 // pred_check_branch
      %118 = sbr.rel (0) target = $region57
    $region56: #{tpu_custom_call.1} parent=1 // pred_region
      %119 = dma.done [#allocation6], 256
    $region57: #{tpu_custom_call.1} parent=1 // pred_fallthru
      _
    // Predicated region
    $region58: #{tpu_custom_call.1} parent=1 // pred_check
      _
    $region59: #{tpu_custom_call.1} parent=1 // pred_check_branch
      %121 = sbr.rel (0) target = $region61
    $region60: #{tpu_custom_call.1} parent=1 // pred_region
      %122 = dma.done [#allocation9], 512
    $region61: #{tpu_custom_call.1} parent=1 // pred_fallthru
      _
    // Predicated region
    $region62: #{tpu_custom_call.1} parent=1 // pred_check
      _
    $region63: #{tpu_custom_call.1} parent=1 // pred_check_branch
      %124 = sbr.rel (0) target = $region65
    $region64: #{tpu_custom_call.1} parent=1 // pred_region
      %125 = dma.done [#allocation9], 512
    $region65: #{tpu_custom_call.1} parent=1 // pred_fallthru
      _
    // Predicated region
    $region66: #{tpu_custom_call.1} parent=1 // pred_check
      _
    $region67: #{tpu_custom_call.1} parent=1 // pred_check_branch
      %127 = sbr.rel (0) target = $region69
    $region68: #{tpu_custom_call.1} parent=1 // pred_region
      %128 = dma.done [#allocation12], 512
    $region69: #{tpu_custom_call.1} parent=1 // pred_fallthru
      _
    // Predicated region
    $region70: #{tpu_custom_call.1} parent=1 // pred_check
      _
    $region71: #{tpu_custom_call.1} parent=1 // pred_check_branch
      %130 = sbr.rel (0) target = $region73
    $region72: #{tpu_custom_call.1} parent=1 // pred_region
      %131 = dma.done [#allocation12], 16
    $region73: #{tpu_custom_call.1} parent=1 // pred_fallthru
      _
    %v132 = vld [vmem:[#allocation2] sm:$0xff]
    %v133 = vld [vmem:[#allocation2 + $0x8] sm:$0xff]
    %v134 = vld [vmem:[#allocation8] sm:$0xff]
    %v135 = vld [vmem:[#allocation8 + $0x8] sm:$0xff]
    %v136 = vld [vmem:[#allocation8 + $0x10] sm:$0xff]
    %v137 = vld [vmem:[#allocation8 + $0x18] sm:$0xff]
    %v138 = vld [vmem:[%s4] sm:$0x1]
    %v140 = vlaneseq
    %v141 = vshrl.u32 %v140, 7
    %v142 = vsub.s32 0, %v141
    %v143 = vrot.slane %v138, %v142
    %vm145 = vcmask 261120
    %v147 = vsel %vm145, %v132, 0
    %v150 = vsel %vm145, %v133, 0
    %152 = vmatprep.subr.mxu0 0.0
    %153 = vmatpush1.msra.mxu0 %v134
    %154 = vmatprep.subr.mxu0 0.0
    %155 = vmatpush1.msra.mxu0 %v135
    %156 = vmatprep.subr.mxu0 0.0
    %157 = vmatpush1.msra.mxu0 %v136
    %158 = vmatprep.subr.mxu0 0.0
    %159 = vmatpush1.msra.mxu0 %v137
    %160 = vmatprep.subr.mxu0 0.0
    %161 = vmatpush1.msra.mxu0 0.0
    %162 = vmatprep.subr.mxu0 0.0
    %163 = vmatpush1.msra.mxu0 0.0
    %164 = vmatprep.subr.mxu0 0.0
    %165 = vmatpush1.msra.mxu0 0.0
    %166 = vmatprep.subr.mxu0 0.0
    %167 = vmatpush1.msra.mxu0 0.0
    %168 = vmatprep.subr.mxu0 0.0
    %169 = vmatpush1.msra.mxu0 0.0
    %170 = vmatprep.subr.mxu0 0.0
    %171 = vmatpush1.msra.mxu0 0.0
    %172 = vmatprep.subr.mxu0 0.0
    %173 = vmatpush1.msra.mxu0 0.0
    %174 = vmatprep.subr.mxu0 0.0
    %175 = vmatpush1.msra.mxu0 0.0
    %176 = vmatprep.subr.mxu0 0.0
    %177 = vmatpush1.msra.mxu0 0.0
    %178 = vmatprep.subr.mxu0 0.0
    %179 = vmatpush1.msra.mxu0 0.0
    %180 = vmatprep.subr.mxu0 0.0
    %181 = vmatpush1.msra.mxu0 0.0
    %182 = vmatprep.subr.mxu0 0.0
    %183 = vmatpush1.msra.mxu0 0.0
    %184 = vmatprep.subr.mxu0 0.0
    %185 = vmatpush1.msra.mxu0 0.0
    %186 = vmatprep.subr.mxu0 0.0
    %187 = vmatpush1.msra.mxu0 0.0
    %188 = vmatprep.subr.mxu0 0.0
    %189 = vmatpush1.msra.mxu0 0.0
    %190 = vmatprep.subr.mxu0 0.0
    %191 = vmatpush1.msra.mxu0 0.0
    %192 = vmatprep.subr.mxu0 0.0
    %193 = vmatpush1.msra.mxu0 0.0
    %194 = vmatprep.subr.mxu0 0.0
    %195 = vmatpush1.msra.mxu0 0.0
    %196 = vmatprep.subr.mxu0 0.0
    %197 = vmatpush1.msra.mxu0 0.0
    %198 = vmatprep.subr.mxu0 0.0
    %199 = vmatpush1.msra.mxu0 0.0
    %200 = vmatprep.subr.mxu0 0.0
    %201 = vmatpush1.msra.mxu0 0.0
    %202 = vmatprep.subr.mxu0 0.0
    %203 = vmatpush1.msra.mxu0 0.0
    %204 = vmatprep.subr.mxu0 0.0
    %205 = vmatpush1.msra.mxu0 0.0
    %206 = vmatprep.subr.mxu0 0.0
    %207 = vmatpush1.msra.mxu0 0.0
    %208 = vmatprep.subr.mxu0 0.0
    %209 = vmatpush1.msra.mxu0 0.0
    %210 = vmatprep.subr.mxu0 0.0
    %211 = vmatpush1.msra.mxu0 0.0
    %212 = vmatprep.subr.mxu0 0.0
    %213 = vmatpush1.msra.mxu0 0.0
    %214 = vmatprep.subr.mxu0 0.0
    %215 = vmatpush1.msra.mxu0 0.0
    %216 = vmatprep.mubr.f32.mxu0 0.0
    %217 = vmatmul.mubr.f32.gmra.mrb[0].mxu0 %v147
    %v218 = vpop.f32.mrb[0].mxu0
    %v219 = vadd.f32 %v143, %v218
    %v220 = vpop.f32.mrb[0].mxu0
    %221 = vmatprep.mubr.f32.mxu0 0.0
    %222 = vmatmul.mubr.f32.gmra.mrb[0].mxu0 %v150
    %v223 = vpop.f32.mrb[0].mxu0
    %v224 = vadd.f32 %v143, %v223
    %v225 = vpop.f32.mrb[0].mxu0
    %226 = vdwg.mxu0
    %v227 = vld [vmem:[#allocation5] sm:$0xff]
    %v228 = vld [vmem:[#allocation5 + $0x8] sm:$0xff]
    %v229 = vld [vmem:[#allocation10] sm:$0xff]
    %v230 = vld [vmem:[#allocation10 + $0x8] sm:$0xff]
    %v231 = vld [vmem:[#allocation10 + $0x10] sm:$0xff]
    %v232 = vld [vmem:[#allocation10 + $0x18] sm:$0xff]
    %v233 = vld [vmem:[%s6] sm:$0x1]
    %v235 = vlaneseq
    %v236 = vshrl.u32 %v235, 7
    %v237 = vsub.s32 0, %v236
    %v238 = vrot.slane %v233, %v237
    %v241 = vsel %vm145, %v227, 0
    %v244 = vsel %vm145, %v228, 0
    %246 = vmatprep.subr.mxu0 0.0
    %247 = vmatpush1.msra.mxu0 %v229
    %248 = vmatprep.subr.mxu0 0.0
    %249 = vmatpush1.msra.mxu0 %v230
    %250 = vmatprep.subr.mxu0 0.0
    %251 = vmatpush1.msra.mxu0 %v231
    %252 = vmatprep.subr.mxu0 0.0
    %253 = vmatpush1.msra.mxu0 %v232
    %254 = vmatprep.subr.mxu0 0.0
    %255 = vmatpush1.msra.mxu0 0.0
    %256 = vmatprep.subr.mxu0 0.0
    %257 = vmatpush1.msra.mxu0 0.0
    %258 = vmatprep.subr.mxu0 0.0
    %259 = vmatpush1.msra.mxu0 0.0
    %260 = vmatprep.subr.mxu0 0.0
    %261 = vmatpush1.msra.mxu0 0.0
    %262 = vmatprep.subr.mxu0 0.0
    %263 = vmatpush1.msra.mxu0 0.0
    %264 = vmatprep.subr.mxu0 0.0
    %265 = vmatpush1.msra.mxu0 0.0
    %266 = vmatprep.subr.mxu0 0.0
    %267 = vmatpush1.msra.mxu0 0.0
    %268 = vmatprep.subr.mxu0 0.0
    %269 = vmatpush1.msra.mxu0 0.0
    %270 = vmatprep.subr.mxu0 0.0
    %271 = vmatpush1.msra.mxu0 0.0
    %272 = vmatprep.subr.mxu0 0.0
    %273 = vmatpush1.msra.mxu0 0.0
    %274 = vmatprep.subr.mxu0 0.0
    %275 = vmatpush1.msra.mxu0 0.0
    %276 = vmatprep.subr.mxu0 0.0
    %277 = vmatpush1.msra.mxu0 0.0
    %278 = vmatprep.subr.mxu0 0.0
    %279 = vmatpush1.msra.mxu0 0.0
    %280 = vmatprep.subr.mxu0 0.0
    %281 = vmatpush1.msra.mxu0 0.0
    %282 = vmatprep.subr.mxu0 0.0
    %283 = vmatpush1.msra.mxu0 0.0
    %284 = vmatprep.subr.mxu0 0.0
    %285 = vmatpush1.msra.mxu0 0.0
    %286 = vmatprep.subr.mxu0 0.0
    %287 = vmatpush1.msra.mxu0 0.0
    %288 = vmatprep.subr.mxu0 0.0
    %289 = vmatpush1.msra.mxu0 0.0
    %290 = vmatprep.subr.mxu0 0.0
    %291 = vmatpush1.msra.mxu0 0.0
    %292 = vmatprep.subr.mxu0 0.0
    %293 = vmatpush1.msra.mxu0 0.0
    %294 = vmatprep.subr.mxu0 0.0
    %295 = vmatpush1.msra.mxu0 0.0
    %296 = vmatprep.subr.mxu0 0.0
    %297 = vmatpush1.msra.mxu0 0.0
    %298 = vmatprep.subr.mxu0 0.0
    %299 = vmatpush1.msra.mxu0 0.0
    %300 = vmatprep.subr.mxu0 0.0
    %301 = vmatpush1.msra.mxu0 0.0
    %302 = vmatprep.subr.mxu0 0.0
    %303 = vmatpush1.msra.mxu0 0.0
    %304 = vmatprep.subr.mxu0 0.0
    %305 = vmatpush1.msra.mxu0 0.0
    %306 = vmatprep.subr.mxu0 0.0
    %307 = vmatpush1.msra.mxu0 0.0
    %308 = vmatprep.subr.mxu0 0.0
    %309 = vmatpush1.msra.mxu0 0.0
    %310 = vmatprep.mubr.f32.mxu0 0.0
    %311 = vmatmul.mubr.f32.gmra.mrb[0].mxu0 %v241
    %v312 = vpop.f32.mrb[0].mxu0
    %v313 = vadd.f32 %v238, %v312
    %v314 = vpop.f32.mrb[0].mxu0
    %315 = vmatprep.mubr.f32.mxu0 0.0
    %316 = vmatmul.mubr.f32.gmra.mrb[0].mxu0 %v244
    %v317 = vpop.f32.mrb[0].mxu0
    %v318 = vadd.f32 %v238, %v317
    %v319 = vpop.f32.mrb[0].mxu0
    %320 = vdwg.mxu0
    %v321 = vld [vmem:[#allocation7] sm:$0xff]
    %v322 = vld [vmem:[#allocation7 + $0x8] sm:$0xff]
    %v323 = vld [vmem:[#allocation11] sm:$0xff]
    %v324 = vld [vmem:[#allocation11 + $0x8] sm:$0xff]
    %v325 = vld [vmem:[#allocation11 + $0x10] sm:$0xff]
    %v326 = vld [vmem:[#allocation11 + $0x18] sm:$0xff]
    %v327 = vld [vmem:[#allocation13] sm:$0x1]
    %v329 = vlaneseq
    %v330 = vshrl.u32 %v329, 7
    %v331 = vsub.s32 0, %v330
    %v332 = vrot.slane %v327, %v331
    %v335 = vsel %vm145, %v321, 0
    %v338 = vsel %vm145, %v322, 0
    %340 = vmatprep.subr.mxu0 0.0
    %341 = vmatpush1.msra.mxu0 %v323
    %342 = vmatprep.subr.mxu0 0.0
    %343 = vmatpush1.msra.mxu0 %v324
    %344 = vmatprep.subr.mxu0 0.0
    %345 = vmatpush1.msra.mxu0 %v325
    %346 = vmatprep.subr.mxu0 0.0
    %347 = vmatpush1.msra.mxu0 %v326
    %348 = vmatprep.subr.mxu0 0.0
    %349 = vmatpush1.msra.mxu0 0.0
    %350 = vmatprep.subr.mxu0 0.0
    %351 = vmatpush1.msra.mxu0 0.0
    %352 = vmatprep.subr.mxu0 0.0
    %353 = vmatpush1.msra.mxu0 0.0
    %354 = vmatprep.subr.mxu0 0.0
    %355 = vmatpush1.msra.mxu0 0.0
    %356 = vmatprep.subr.mxu0 0.0
    %357 = vmatpush1.msra.mxu0 0.0
    %358 = vmatprep.subr.mxu0 0.0
    %359 = vmatpush1.msra.mxu0 0.0
    %360 = vmatprep.subr.mxu0 0.0
    %361 = vmatpush1.msra.mxu0 0.0
    %362 = vmatprep.subr.mxu0 0.0
    %363 = vmatpush1.msra.mxu0 0.0
    %364 = vmatprep.subr.mxu0 0.0
    %365 = vmatpush1.msra.mxu0 0.0
    %366 = vmatprep.subr.mxu0 0.0
    %367 = vmatpush1.msra.mxu0 0.0
    %368 = vmatprep.subr.mxu0 0.0
    %369 = vmatpush1.msra.mxu0 0.0
    %370 = vmatprep.subr.mxu0 0.0
    %371 = vmatpush1.msra.mxu0 0.0
    %372 = vmatprep.subr.mxu0 0.0
    %373 = vmatpush1.msra.mxu0 0.0
    %374 = vmatprep.subr.mxu0 0.0
    %375 = vmatpush1.msra.mxu0 0.0
    %376 = vmatprep.subr.mxu0 0.0
    %377 = vmatpush1.msra.mxu0 0.0
    %378 = vmatprep.subr.mxu0 0.0
    %379 = vmatpush1.msra.mxu0 0.0
    %380 = vmatprep.subr.mxu0 0.0
    %381 = vmatpush1.msra.mxu0 0.0
    %382 = vmatprep.subr.mxu0 0.0
    %383 = vmatpush1.msra.mxu0 0.0
    %384 = vmatprep.subr.mxu0 0.0
    %385 = vmatpush1.msra.mxu0 0.0
    %386 = vmatprep.subr.mxu0 0.0
    %387 = vmatpush1.msra.mxu0 0.0
    %388 = vmatprep.subr.mxu0 0.0
    %389 = vmatpush1.msra.mxu0 0.0
    %390 = vmatprep.subr.mxu0 0.0
    %391 = vmatpush1.msra.mxu0 0.0
    %392 = vmatprep.subr.mxu0 0.0
    %393 = vmatpush1.msra.mxu0 0.0
    %394 = vmatprep.subr.mxu0 0.0
    %395 = vmatpush1.msra.mxu0 0.0
    %396 = vmatprep.subr.mxu0 0.0
    %397 = vmatpush1.msra.mxu0 0.0
    %398 = vmatprep.subr.mxu0 0.0
    %399 = vmatpush1.msra.mxu0 0.0
    %400 = vmatprep.subr.mxu0 0.0
    %401 = vmatpush1.msra.mxu0 0.0
    %402 = vmatprep.subr.mxu0 0.0
    %403 = vmatpush1.msra.mxu0 0.0
    %404 = vmatprep.mubr.f32.mxu0 0.0
    %405 = vmatmul.mubr.f32.gmra.mrb[0].mxu0 %v335
    %v406 = vpop.f32.mrb[0].mxu0
    %v407 = vadd.f32 %v332, %v406
    %v408 = vpop.f32.mrb[0].mxu0
    %409 = vmatprep.mubr.f32.mxu0 0.0
    %410 = vmatmul.mubr.f32.gmra.mrb[0].mxu0 %v338
    %v411 = vpop.f32.mrb[0].mxu0
    %v412 = vadd.f32 %v332, %v411
    %v413 = vpop.f32.mrb[0].mxu0
    %414 = vdwg.mxu0
    %vm415 = vcmask 64512
    %v417 = vsel %vm415, %v219, 0
    %v420 = vsel %vm415, %v313, 0
    %422 = vmatprep.subr.mxu0 0.0
    %423 = vmatpush1.xpose.msra.mxu0 %v420
    %424 = vmatprep.subr.mxu0 0.0
    %425 = vmatpush1.xpose.msra.mxu0 0.0
    %426 = vmatprep.subr.mxu0 0.0
    %427 = vmatpush1.xpose.msra.mxu0 0.0
    %428 = vmatprep.subr.mxu0 0.0
    %429 = vmatpush1.xpose.msra.mxu0 0.0
    %430 = vmatprep.subr.mxu0 0.0
    %431 = vmatpush1.xpose.msra.mxu0 0.0
    %432 = vmatprep.subr.mxu0 0.0
    %433 = vmatpush1.xpose.msra.mxu0 0.0
    %434 = vmatprep.subr.mxu0 0.0
    %435 = vmatpush1.xpose.msra.mxu0 0.0
    %436 = vmatprep.subr.mxu0 0.0
    %437 = vmatpush1.xpose.msra.mxu0 0.0
    %438 = vmatprep.subr.mxu0 0.0
    %439 = vmatpush1.xpose.msra.mxu0 0.0
    %440 = vmatprep.subr.mxu0 0.0
    %441 = vmatpush1.xpose.msra.mxu0 0.0
    %442 = vmatprep.subr.mxu0 0.0
    %443 = vmatpush1.xpose.msra.mxu0 0.0
    %444 = vmatprep.subr.mxu0 0.0
    %445 = vmatpush1.xpose.msra.mxu0 0.0
    %446 = vmatprep.subr.mxu0 0.0
    %447 = vmatpush1.xpose.msra.mxu0 0.0
    %448 = vmatprep.subr.mxu0 0.0
    %449 = vmatpush1.xpose.msra.mxu0 0.0
    %450 = vmatprep.subr.mxu0 0.0
    %451 = vmatpush1.xpose.msra.mxu0 0.0
    %452 = vmatprep.subr.mxu0 0.0
    %453 = vmatpush1.xpose.msra.mxu0 0.0
    %454 = vmatprep.subr.mxu0 0.0
    %455 = vmatpush1.xpose.msra.mxu0 0.0
    %456 = vmatprep.subr.mxu0 0.0
    %457 = vmatpush1.xpose.msra.mxu0 0.0
    %458 = vmatprep.subr.mxu0 0.0
    %459 = vmatpush1.xpose.msra.mxu0 0.0
    %460 = vmatprep.subr.mxu0 0.0
    %461 = vmatpush1.xpose.msra.mxu0 0.0
    %462 = vmatprep.subr.mxu0 0.0
    %463 = vmatpush1.xpose.msra.mxu0 0.0
    %464 = vmatprep.subr.mxu0 0.0
    %465 = vmatpush1.xpose.msra.mxu0 0.0
    %466 = vmatprep.subr.mxu0 0.0
    %467 = vmatpush1.xpose.msra.mxu0 0.0
    %468 = vmatprep.subr.mxu0 0.0
    %469 = vmatpush1.xpose.msra.mxu0 0.0
    %470 = vmatprep.subr.mxu0 0.0
    %471 = vmatpush1.xpose.msra.mxu0 0.0
    %472 = vmatprep.subr.mxu0 0.0
    %473 = vmatpush1.xpose.msra.mxu0 0.0
    %474 = vmatprep.subr.mxu0 0.0
    %475 = vmatpush1.xpose.msra.mxu0 0.0
    %476 = vmatprep.subr.mxu0 0.0
    %477 = vmatpush1.xpose.msra.mxu0 0.0
    %478 = vmatprep.subr.mxu0 0.0
    %479 = vmatpush1.xpose.msra.mxu0 0.0
    %480 = vmatprep.subr.mxu0 0.0
    %481 = vmatpush1.xpose.msra.mxu0 0.0
    %482 = vmatprep.subr.mxu0 0.0
    %483 = vmatpush1.xpose.msra.mxu0 0.0
    %484 = vmatprep.subr.mxu0 0.0
    %485 = vmatpush1.xpose.msra.mxu0 0.0
    %486 = vmatprep.mubr.f32.mxu0 0.0
    %487 = vmatmul.mubr.f32.gmra.mrb[0].mxu0 %v417
    %v488 = vpop.f32.mrb[0].mxu0
    %v489 = vadd.f32 0.0, %v488
    %v490 = vpop.f32.mrb[0].mxu0
    %491 = vdwg.mxu0
    %v492 = vmul.f32 %v489, 0.35355338
    %v493 = vsel %vm415, %v492, -inf
    %494 = vmax.xlane.f32.xlu0 %v493
    %v495 = vpop.xlane.xlu0 %494
    %v496 = vsub.f32 %v492, %v495
    %v497 = vmul.f32 %v496, 1.442695
    %v498 = vpow.pop %v497
    %v499 = vsel %vm415, %v498, 0.0
    %500 = vadd.xlane.f32.xlu0 %v499
    %v501 = vpop.xlane.xlu0 %500
    %v502 = vrcp.pop %v501
    %v503 = vmul.f32 %v498, %v502
    %v505 = vsel %vm415, %v503, 0
    %507 = vmatprep.subr.mxu0 0.0
    %508 = vmatpush1.msra.mxu0 %v407
    %509 = vmatprep.subr.mxu0 0.0
    %510 = vmatpush1.msra.mxu0 0.0
    %511 = vmatprep.subr.mxu0 0.0
    %512 = vmatpush1.msra.mxu0 0.0
    %513 = vmatprep.subr.mxu0 0.0
    %514 = vmatpush1.msra.mxu0 0.0
    %515 = vmatprep.subr.mxu0 0.0
    %516 = vmatpush1.msra.mxu0 0.0
    %517 = vmatprep.subr.mxu0 0.0
    %518 = vmatpush1.msra.mxu0 0.0
    %519 = vmatprep.subr.mxu0 0.0
    %520 = vmatpush1.msra.mxu0 0.0
    %521 = vmatprep.subr.mxu0 0.0
    %522 = vmatpush1.msra.mxu0 0.0
    %523 = vmatprep.subr.mxu0 0.0
    %524 = vmatpush1.msra.mxu0 0.0
    %525 = vmatprep.subr.mxu0 0.0
    %526 = vmatpush1.msra.mxu0 0.0
    %527 = vmatprep.subr.mxu0 0.0
    %528 = vmatpush1.msra.mxu0 0.0
    %529 = vmatprep.subr.mxu0 0.0
    %530 = vmatpush1.msra.mxu0 0.0
    %531 = vmatprep.subr.mxu0 0.0
    %532 = vmatpush1.msra.mxu0 0.0
    %533 = vmatprep.subr.mxu0 0.0
    %534 = vmatpush1.msra.mxu0 0.0
    %535 = vmatprep.subr.mxu0 0.0
    %536 = vmatpush1.msra.mxu0 0.0
    %537 = vmatprep.subr.mxu0 0.0
    %538 = vmatpush1.msra.mxu0 0.0
    %539 = vmatprep.subr.mxu0 0.0
    %540 = vmatpush1.msra.mxu0 0.0
    %541 = vmatprep.subr.mxu0 0.0
    %542 = vmatpush1.msra.mxu0 0.0
    %543 = vmatprep.subr.mxu0 0.0
    %544 = vmatpush1.msra.mxu0 0.0
    %545 = vmatprep.subr.mxu0 0.0
    %546 = vmatpush1.msra.mxu0 0.0
    %547 = vmatprep.subr.mxu0 0.0
    %548 = vmatpush1.msra.mxu0 0.0
    %549 = vmatprep.subr.mxu0 0.0
    %550 = vmatpush1.msra.mxu0 0.0
    %551 = vmatprep.subr.mxu0 0.0
    %552 = vmatpush1.msra.mxu0 0.0
    %553 = vmatprep.subr.mxu0 0.0
    %554 = vmatpush1.msra.mxu0 0.0
    %555 = vmatprep.subr.mxu0 0.0
    %556 = vmatpush1.msra.mxu0 0.0
    %557 = vmatprep.subr.mxu0 0.0
    %558 = vmatpush1.msra.mxu0 0.0
    %559 = vmatprep.subr.mxu0 0.0
    %560 = vmatpush1.msra.mxu0 0.0
    %561 = vmatprep.subr.mxu0 0.0
    %562 = vmatpush1.msra.mxu0 0.0
    %563 = vmatprep.subr.mxu0 0.0
    %564 = vmatpush1.msra.mxu0 0.0
    %565 = vmatprep.subr.mxu0 0.0
    %566 = vmatpush1.msra.mxu0 0.0
    %567 = vmatprep.subr.mxu0 0.0
    %568 = vmatpush1.msra.mxu0 0.0
    %569 = vmatprep.subr.mxu0 0.0
    %570 = vmatpush1.msra.mxu0 0.0
    %571 = vmatprep.mubr.f32.mxu0 0.0
    %572 = vmatmul.mubr.f32.gmra.mrb[0].mxu0 %v505
    %v573 = vpop.f32.mrb[0].mxu0
    %v574 = vadd.f32 0.0, %v573
    %v575 = vpop.f32.mrb[0].mxu0
    %576 = vdwg.mxu0
    %577 = vrot.lane.b32.xlu0 %v219, 120
    %v578 = vpop.permute.xlu0 %577
    %579 = vrot.lane.b32.xlu0 %v313, 120
    %v580 = vpop.permute.xlu0 %579
    %v581 = vsel %vm415, %v578, 0
    %v583 = vsel %vm415, %v580, 0
    %585 = vmatprep.subr.mxu0 0.0
    %586 = vmatpush1.xpose.msra.mxu0 %v583
    %587 = vmatprep.subr.mxu0 0.0
    %588 = vmatpush1.xpose.msra.mxu0 0.0
    %589 = vmatprep.subr.mxu0 0.0
    %590 = vmatpush1.xpose.msra.mxu0 0.0
    %591 = vmatprep.subr.mxu0 0.0
    %592 = vmatpush1.xpose.msra.mxu0 0.0
    %593 = vmatprep.subr.mxu0 0.0
    %594 = vmatpush1.xpose.msra.mxu0 0.0
    %595 = vmatprep.subr.mxu0 0.0
    %596 = vmatpush1.xpose.msra.mxu0 0.0
    %597 = vmatprep.subr.mxu0 0.0
    %598 = vmatpush1.xpose.msra.mxu0 0.0
    %599 = vmatprep.subr.mxu0 0.0
    %600 = vmatpush1.xpose.msra.mxu0 0.0
    %601 = vmatprep.subr.mxu0 0.0
    %602 = vmatpush1.xpose.msra.mxu0 0.0
    %603 = vmatprep.subr.mxu0 0.0
    %604 = vmatpush1.xpose.msra.mxu0 0.0
    %605 = vmatprep.subr.mxu0 0.0
    %606 = vmatpush1.xpose.msra.mxu0 0.0
    %607 = vmatprep.subr.mxu0 0.0
    %608 = vmatpush1.xpose.msra.mxu0 0.0
    %609 = vmatprep.subr.mxu0 0.0
    %610 = vmatpush1.xpose.msra.mxu0 0.0
    %611 = vmatprep.subr.mxu0 0.0
    %612 = vmatpush1.xpose.msra.mxu0 0.0
    %613 = vmatprep.subr.mxu0 0.0
    %614 = vmatpush1.xpose.msra.mxu0 0.0
    %615 = vmatprep.subr.mxu0 0.0
    %616 = vmatpush1.xpose.msra.mxu0 0.0
    %617 = vmatprep.subr.mxu0 0.0
    %618 = vmatpush1.xpose.msra.mxu0 0.0
    %619 = vmatprep.subr.mxu0 0.0
    %620 = vmatpush1.xpose.msra.mxu0 0.0
    %621 = vmatprep.subr.mxu0 0.0
    %622 = vmatpush1.xpose.msra.mxu0 0.0
    %623 = vmatprep.subr.mxu0 0.0
    %624 = vmatpush1.xpose.msra.mxu0 0.0
    %625 = vmatprep.subr.mxu0 0.0
    %626 = vmatpush1.xpose.msra.mxu0 0.0
    %627 = vmatprep.subr.mxu0 0.0
    %628 = vmatpush1.xpose.msra.mxu0 0.0
    %629 = vmatprep.subr.mxu0 0.0
    %630 = vmatpush1.xpose.msra.mxu0 0.0
    %631 = vmatprep.subr.mxu0 0.0
    %632 = vmatpush1.xpose.msra.mxu0 0.0
    %633 = vmatprep.subr.mxu0 0.0
    %634 = vmatpush1.xpose.msra.mxu0 0.0
    %635 = vmatprep.subr.mxu0 0.0
    %636 = vmatpush1.xpose.msra.mxu0 0.0
    %637 = vmatprep.subr.mxu0 0.0
    %638 = vmatpush1.xpose.msra.mxu0 0.0
    %639 = vmatprep.subr.mxu0 0.0
    %640 = vmatpush1.xpose.msra.mxu0 0.0
    %641 = vmatprep.subr.mxu0 0.0
    %642 = vmatpush1.xpose.msra.mxu0 0.0
    %643 = vmatprep.subr.mxu0 0.0
    %644 = vmatpush1.xpose.msra.mxu0 0.0
    %645 = vmatprep.subr.mxu0 0.0
    %646 = vmatpush1.xpose.msra.mxu0 0.0
    %647 = vmatprep.subr.mxu0 0.0
    %648 = vmatpush1.xpose.msra.mxu0 0.0
    %649 = vmatprep.mubr.f32.mxu0 0.0
    %650 = vmatmul.mubr.f32.gmra.mrb[0].mxu0 %v581
    %v651 = vpop.f32.mrb[0].mxu0
    %v652 = vadd.f32 0.0, %v651
    %v653 = vpop.f32.mrb[0].mxu0
    %654 = vdwg.mxu0
    %v655 = vmul.f32 %v652, 0.35355338
    %v656 = vsel %vm415, %v655, -inf
    %657 = vmax.xlane.f32.xlu0 %v656
    %v658 = vpop.xlane.xlu0 %657
    %v659 = vsub.f32 %v655, %v658
    %v660 = vmul.f32 %v659, 1.442695
    %v661 = vpow.pop %v660
    %v662 = vsel %vm415, %v661, 0.0
    %663 = vadd.xlane.f32.xlu0 %v662
    %v664 = vpop.xlane.xlu0 %663
    %v665 = vrcp.pop %v664
    %v666 = vmul.f32 %v661, %v665
    %668 = vrot.lane.b32.xlu0 %v407, 120
    %v669 = vpop.permute.xlu0 %668
    %v672 = vsel %vm415, %v666, 0
    %674 = vmatprep.subr.mxu0 0.0
    %675 = vmatpush1.msra.mxu0 %v669
    %676 = vmatprep.subr.mxu0 0.0
    %677 = vmatpush1.msra.mxu0 0.0
    %678 = vmatprep.subr.mxu0 0.0
    %679 = vmatpush1.msra.mxu0 0.0
    %680 = vmatprep.subr.mxu0 0.0
    %681 = vmatpush1.msra.mxu0 0.0
    %682 = vmatprep.subr.mxu0 0.0
    %683 = vmatpush1.msra.mxu0 0.0
    %684 = vmatprep.subr.mxu0 0.0
    %685 = vmatpush1.msra.mxu0 0.0
    %686 = vmatprep.subr.mxu0 0.0
    %687 = vmatpush1.msra.mxu0 0.0
    %688 = vmatprep.subr.mxu0 0.0
    %689 = vmatpush1.msra.mxu0 0.0
    %690 = vmatprep.subr.mxu0 0.0
    %691 = vmatpush1.msra.mxu0 0.0
    %692 = vmatprep.subr.mxu0 0.0
    %693 = vmatpush1.msra.mxu0 0.0
    %694 = vmatprep.subr.mxu0 0.0
    %695 = vmatpush1.msra.mxu0 0.0
    %696 = vmatprep.subr.mxu0 0.0
    %697 = vmatpush1.msra.mxu0 0.0
    %698 = vmatprep.subr.mxu0 0.0
    %699 = vmatpush1.msra.mxu0 0.0
    %700 = vmatprep.subr.mxu0 0.0
    %701 = vmatpush1.msra.mxu0 0.0
    %702 = vmatprep.subr.mxu0 0.0
    %703 = vmatpush1.msra.mxu0 0.0
    %704 = vmatprep.subr.mxu0 0.0
    %705 = vmatpush1.msra.mxu0 0.0
    %706 = vmatprep.subr.mxu0 0.0
    %707 = vmatpush1.msra.mxu0 0.0
    %708 = vmatprep.subr.mxu0 0.0
    %709 = vmatpush1.msra.mxu0 0.0
    %710 = vmatprep.subr.mxu0 0.0
    %711 = vmatpush1.msra.mxu0 0.0
    %712 = vmatprep.subr.mxu0 0.0
    %713 = vmatpush1.msra.mxu0 0.0
    %714 = vmatprep.subr.mxu0 0.0
    %715 = vmatpush1.msra.mxu0 0.0
    %716 = vmatprep.subr.mxu0 0.0
    %717 = vmatpush1.msra.mxu0 0.0
    %718 = vmatprep.subr.mxu0 0.0
    %719 = vmatpush1.msra.mxu0 0.0
    %720 = vmatprep.subr.mxu0 0.0
    %721 = vmatpush1.msra.mxu0 0.0
    %722 = vmatprep.subr.mxu0 0.0
    %723 = vmatpush1.msra.mxu0 0.0
    %724 = vmatprep.subr.mxu0 0.0
    %725 = vmatpush1.msra.mxu0 0.0
    %726 = vmatprep.subr.mxu0 0.0
    %727 = vmatpush1.msra.mxu0 0.0
    %728 = vmatprep.subr.mxu0 0.0
    %729 = vmatpush1.msra.mxu0 0.0
    %730 = vmatprep.subr.mxu0 0.0
    %731 = vmatpush1.msra.mxu0 0.0
    %732 = vmatprep.subr.mxu0 0.0
    %733 = vmatpush1.msra.mxu0 0.0
    %734 = vmatprep.subr.mxu0 0.0
    %735 = vmatpush1.msra.mxu0 0.0
    %736 = vmatprep.subr.mxu0 0.0
    %737 = vmatpush1.msra.mxu0 0.0
    %738 = vmatprep.mubr.f32.mxu0 0.0
    %739 = vmatmul.mubr.f32.gmra.mrb[0].mxu0 %v672
    %v740 = vpop.f32.mrb[0].mxu0
    %v741 = vadd.f32 0.0, %v740
    %v742 = vpop.f32.mrb[0].mxu0
    %743 = vdwg.mxu0
    %744 = vrot.lane.b32.xlu0 %v219, 112
    %v745 = vpop.permute.xlu0 %744
    %746 = vrot.lane.b32.xlu0 %v313, 112
    %v747 = vpop.permute.xlu0 %746
    %v748 = vsel %vm415, %v745, 0
    %v750 = vsel %vm415, %v747, 0
    %752 = vmatprep.subr.mxu0 0.0
    %753 = vmatpush1.xpose.msra.mxu0 %v750
    %754 = vmatprep.subr.mxu0 0.0
    %755 = vmatpush1.xpose.msra.mxu0 0.0
    %756 = vmatprep.subr.mxu0 0.0
    %757 = vmatpush1.xpose.msra.mxu0 0.0
    %758 = vmatprep.subr.mxu0 0.0
    %759 = vmatpush1.xpose.msra.mxu0 0.0
    %760 = vmatprep.subr.mxu0 0.0
    %761 = vmatpush1.xpose.msra.mxu0 0.0
    %762 = vmatprep.subr.mxu0 0.0
    %763 = vmatpush1.xpose.msra.mxu0 0.0
    %764 = vmatprep.subr.mxu0 0.0
    %765 = vmatpush1.xpose.msra.mxu0 0.0
    %766 = vmatprep.subr.mxu0 0.0
    %767 = vmatpush1.xpose.msra.mxu0 0.0
    %768 = vmatprep.subr.mxu0 0.0
    %769 = vmatpush1.xpose.msra.mxu0 0.0
    %770 = vmatprep.subr.mxu0 0.0
    %771 = vmatpush1.xpose.msra.mxu0 0.0
    %772 = vmatprep.subr.mxu0 0.0
    %773 = vmatpush1.xpose.msra.mxu0 0.0
    %774 = vmatprep.subr.mxu0 0.0
    %775 = vmatpush1.xpose.msra.mxu0 0.0
    %776 = vmatprep.subr.mxu0 0.0
    %777 = vmatpush1.xpose.msra.mxu0 0.0
    %778 = vmatprep.subr.mxu0 0.0
    %779 = vmatpush1.xpose.msra.mxu0 0.0
    %780 = vmatprep.subr.mxu0 0.0
    %781 = vmatpush1.xpose.msra.mxu0 0.0
    %782 = vmatprep.subr.mxu0 0.0
    %783 = vmatpush1.xpose.msra.mxu0 0.0
    %784 = vmatprep.subr.mxu0 0.0
    %785 = vmatpush1.xpose.msra.mxu0 0.0
    %786 = vmatprep.subr.mxu0 0.0
    %787 = vmatpush1.xpose.msra.mxu0 0.0
    %788 = vmatprep.subr.mxu0 0.0
    %789 = vmatpush1.xpose.msra.mxu0 0.0
    %790 = vmatprep.subr.mxu0 0.0
    %791 = vmatpush1.xpose.msra.mxu0 0.0
    %792 = vmatprep.subr.mxu0 0.0
    %793 = vmatpush1.xpose.msra.mxu0 0.0
    %794 = vmatprep.subr.mxu0 0.0
    %795 = vmatpush1.xpose.msra.mxu0 0.0
    %796 = vmatprep.subr.mxu0 0.0
    %797 = vmatpush1.xpose.msra.mxu0 0.0
    %798 = vmatprep.subr.mxu0 0.0
    %799 = vmatpush1.xpose.msra.mxu0 0.0
    %800 = vmatprep.subr.mxu0 0.0
    %801 = vmatpush1.xpose.msra.mxu0 0.0
    %802 = vmatprep.subr.mxu0 0.0
    %803 = vmatpush1.xpose.msra.mxu0 0.0
    %804 = vmatprep.subr.mxu0 0.0
    %805 = vmatpush1.xpose.msra.mxu0 0.0
    %806 = vmatprep.subr.mxu0 0.0
    %807 = vmatpush1.xpose.msra.mxu0 0.0
    %808 = vmatprep.subr.mxu0 0.0
    %809 = vmatpush1.xpose.msra.mxu0 0.0
    %810 = vmatprep.subr.mxu0 0.0
    %811 = vmatpush1.xpose.msra.mxu0 0.0
    %812 = vmatprep.subr.mxu0 0.0
    %813 = vmatpush1.xpose.msra.mxu0 0.0
    %814 = vmatprep.subr.mxu0 0.0
    %815 = vmatpush1.xpose.msra.mxu0 0.0
    %816 = vmatprep.mubr.f32.mxu0 0.0
    %817 = vmatmul.mubr.f32.gmra.mrb[0].mxu0 %v748
    %v818 = vpop.f32.mrb[0].mxu0
    %v819 = vadd.f32 0.0, %v818
    %v820 = vpop.f32.mrb[0].mxu0
    %821 = vdwg.mxu0
    %v822 = vmul.f32 %v819, 0.35355338
    %v823 = vsel %vm415, %v822, -inf
    %824 = vmax.xlane.f32.xlu0 %v823
    %v825 = vpop.xlane.xlu0 %824
    %v826 = vsub.f32 %v822, %v825
    %v827 = vmul.f32 %v826, 1.442695
    %v828 = vpow.pop %v827
    %v829 = vsel %vm415, %v828, 0.0
    %830 = vadd.xlane.f32.xlu0 %v829
    %v831 = vpop.xlane.xlu0 %830
    %v832 = vrcp.pop %v831
    %v833 = vmul.f32 %v828, %v832
    %834 = vrot.lane.b32.xlu0 %v407, 112
    %v835 = vpop.permute.xlu0 %834
    %v838 = vsel %vm415, %v833, 0
    %840 = vmatprep.subr.mxu0 0.0
    %841 = vmatpush1.msra.mxu0 %v835
    %842 = vmatprep.subr.mxu0 0.0
    %843 = vmatpush1.msra.mxu0 0.0
    %844 = vmatprep.subr.mxu0 0.0
    %845 = vmatpush1.msra.mxu0 0.0
    %846 = vmatprep.subr.mxu0 0.0
    %847 = vmatpush1.msra.mxu0 0.0
    %848 = vmatprep.subr.mxu0 0.0
    %849 = vmatpush1.msra.mxu0 0.0
    %850 = vmatprep.subr.mxu0 0.0
    %851 = vmatpush1.msra.mxu0 0.0
    %852 = vmatprep.subr.mxu0 0.0
    %853 = vmatpush1.msra.mxu0 0.0
    %854 = vmatprep.subr.mxu0 0.0
    %855 = vmatpush1.msra.mxu0 0.0
    %856 = vmatprep.subr.mxu0 0.0
    %857 = vmatpush1.msra.mxu0 0.0
    %858 = vmatprep.subr.mxu0 0.0
    %859 = vmatpush1.msra.mxu0 0.0
    %860 = vmatprep.subr.mxu0 0.0
    %861 = vmatpush1.msra.mxu0 0.0
    %862 = vmatprep.subr.mxu0 0.0
    %863 = vmatpush1.msra.mxu0 0.0
    %864 = vmatprep.subr.mxu0 0.0
    %865 = vmatpush1.msra.mxu0 0.0
    %866 = vmatprep.subr.mxu0 0.0
    %867 = vmatpush1.msra.mxu0 0.0
    %868 = vmatprep.subr.mxu0 0.0
    %869 = vmatpush1.msra.mxu0 0.0
    %870 = vmatprep.subr.mxu0 0.0
    %871 = vmatpush1.msra.mxu0 0.0
    %872 = vmatprep.subr.mxu0 0.0
    %873 = vmatpush1.msra.mxu0 0.0
    %874 = vmatprep.subr.mxu0 0.0
    %875 = vmatpush1.msra.mxu0 0.0
    %876 = vmatprep.subr.mxu0 0.0
    %877 = vmatpush1.msra.mxu0 0.0
    %878 = vmatprep.subr.mxu0 0.0
    %879 = vmatpush1.msra.mxu0 0.0
    %880 = vmatprep.subr.mxu0 0.0
    %881 = vmatpush1.msra.mxu0 0.0
    %882 = vmatprep.subr.mxu0 0.0
    %883 = vmatpush1.msra.mxu0 0.0
    %884 = vmatprep.subr.mxu0 0.0
    %885 = vmatpush1.msra.mxu0 0.0
    %886 = vmatprep.subr.mxu0 0.0
    %887 = vmatpush1.msra.mxu0 0.0
    %888 = vmatprep.subr.mxu0 0.0
    %889 = vmatpush1.msra.mxu0 0.0
    %890 = vmatprep.subr.mxu0 0.0
    %891 = vmatpush1.msra.mxu0 0.0
    %892 = vmatprep.subr.mxu0 0.0
    %893 = vmatpush1.msra.mxu0 0.0
    %894 = vmatprep.subr.mxu0 0.0
    %895 = vmatpush1.msra.mxu0 0.0
    %896 = vmatprep.subr.mxu0 0.0
    %897 = vmatpush1.msra.mxu0 0.0
    %898 = vmatprep.subr.mxu0 0.0
    %899 = vmatpush1.msra.mxu0 0.0
    %900 = vmatprep.subr.mxu0 0.0
    %901 = vmatpush1.msra.mxu0 0.0
    %902 = vmatprep.subr.mxu0 0.0
    %903 = vmatpush1.msra.mxu0 0.0
    %904 = vmatprep.mubr.f32.mxu0 0.0
    %905 = vmatmul.mubr.f32.gmra.mrb[0].mxu0 %v838
    %v906 = vpop.f32.mrb[0].mxu0
    %v907 = vadd.f32 0.0, %v906
    %v908 = vpop.f32.mrb[0].mxu0
    %909 = vdwg.mxu0
    %910 = vrot.lane.b32.xlu0 %v219, 104
    %v911 = vpop.permute.xlu0 %910
    %912 = vrot.lane.b32.xlu0 %v313, 104
    %v913 = vpop.permute.xlu0 %912
    %v914 = vsel %vm415, %v911, 0
    %v916 = vsel %vm415, %v913, 0
    %918 = vmatprep.subr.mxu0 0.0
    %919 = vmatpush1.xpose.msra.mxu0 %v916
    %920 = vmatprep.subr.mxu0 0.0
    %921 = vmatpush1.xpose.msra.mxu0 0.0
    %922 = vmatprep.subr.mxu0 0.0
    %923 = vmatpush1.xpose.msra.mxu0 0.0
    %924 = vmatprep.subr.mxu0 0.0
    %925 = vmatpush1.xpose.msra.mxu0 0.0
    %926 = vmatprep.subr.mxu0 0.0
    %927 = vmatpush1.xpose.msra.mxu0 0.0
    %928 = vmatprep.subr.mxu0 0.0
    %929 = vmatpush1.xpose.msra.mxu0 0.0
    %930 = vmatprep.subr.mxu0 0.0
    %931 = vmatpush1.xpose.msra.mxu0 0.0
    %932 = vmatprep.subr.mxu0 0.0
    %933 = vmatpush1.xpose.msra.mxu0 0.0
    %934 = vmatprep.subr.mxu0 0.0
    %935 = vmatpush1.xpose.msra.mxu0 0.0
    %936 = vmatprep.subr.mxu0 0.0
    %937 = vmatpush1.xpose.msra.mxu0 0.0
    %938 = vmatprep.subr.mxu0 0.0
    %939 = vmatpush1.xpose.msra.mxu0 0.0
    %940 = vmatprep.subr.mxu0 0.0
    %941 = vmatpush1.xpose.msra.mxu0 0.0
    %942 = vmatprep.subr.mxu0 0.0
    %943 = vmatpush1.xpose.msra.mxu0 0.0
    %944 = vmatprep.subr.mxu0 0.0
    %945 = vmatpush1.xpose.msra.mxu0 0.0
    %946 = vmatprep.subr.mxu0 0.0
    %947 = vmatpush1.xpose.msra.mxu0 0.0
    %948 = vmatprep.subr.mxu0 0.0
    %949 = vmatpush1.xpose.msra.mxu0 0.0
    %950 = vmatprep.subr.mxu0 0.0
    %951 = vmatpush1.xpose.msra.mxu0 0.0
    %952 = vmatprep.subr.mxu0 0.0
    %953 = vmatpush1.xpose.msra.mxu0 0.0
    %954 = vmatprep.subr.mxu0 0.0
    %955 = vmatpush1.xpose.msra.mxu0 0.0
    %956 = vmatprep.subr.mxu0 0.0
    %957 = vmatpush1.xpose.msra.mxu0 0.0
    %958 = vmatprep.subr.mxu0 0.0
    %959 = vmatpush1.xpose.msra.mxu0 0.0
    %960 = vmatprep.subr.mxu0 0.0
    %961 = vmatpush1.xpose.msra.mxu0 0.0
    %962 = vmatprep.subr.mxu0 0.0
    %963 = vmatpush1.xpose.msra.mxu0 0.0
    %964 = vmatprep.subr.mxu0 0.0
    %965 = vmatpush1.xpose.msra.mxu0 0.0
    %966 = vmatprep.subr.mxu0 0.0
    %967 = vmatpush1.xpose.msra.mxu0 0.0
    %968 = vmatprep.subr.mxu0 0.0
    %969 = vmatpush1.xpose.msra.mxu0 0.0
    %970 = vmatprep.subr.mxu0 0.0
    %971 = vmatpush1.xpose.msra.mxu0 0.0
    %972 = vmatprep.subr.mxu0 0.0
    %973 = vmatpush1.xpose.msra.mxu0 0.0
    %974 = vmatprep.subr.mxu0 0.0
    %975 = vmatpush1.xpose.msra.mxu0 0.0
    %976 = vmatprep.subr.mxu0 0.0
    %977 = vmatpush1.xpose.msra.mxu0 0.0
    %978 = vmatprep.subr.mxu0 0.0
    %979 = vmatpush1.xpose.msra.mxu0 0.0
    %980 = vmatprep.subr.mxu0 0.0
    %981 = vmatpush1.xpose.msra.mxu0 0.0
    %982 = vmatprep.mubr.f32.mxu0 0.0
    %983 = vmatmul.mubr.f32.gmra.mrb[0].mxu0 %v914
    %v984 = vpop.f32.mrb[0].mxu0
    %v985 = vadd.f32 0.0, %v984
    %v986 = vpop.f32.mrb[0].mxu0
    %987 = vdwg.mxu0
    %v988 = vmul.f32 %v985, 0.35355338
    %v989 = vsel %vm415, %v988, -inf
    %990 = vmax.xlane.f32.xlu0 %v989
    %v991 = vpop.xlane.xlu0 %990
    %v992 = vsub.f32 %v988, %v991
    %v993 = vmul.f32 %v992, 1.442695
    %v994 = vpow.pop %v993
    %v995 = vsel %vm415, %v994, 0.0
    %996 = vadd.xlane.f32.xlu0 %v995
    %v997 = vpop.xlane.xlu0 %996
    %v998 = vrcp.pop %v997
    %v999 = vmul.f32 %v994, %v998
    %1000 = vrot.lane.b32.xlu0 %v407, 104
    %v1001 = vpop.permute.xlu0 %1000
    %v1004 = vsel %vm415, %v999, 0
    %1006 = vmatprep.subr.mxu0 0.0
    %1007 = vmatpush1.msra.mxu0 %v1001
    %1008 = vmatprep.subr.mxu0 0.0
    %1009 = vmatpush1.msra.mxu0 0.0
    %1010 = vmatprep.subr.mxu0 0.0
    %1011 = vmatpush1.msra.mxu0 0.0
    %1012 = vmatprep.subr.mxu0 0.0
    %1013 = vmatpush1.msra.mxu0 0.0
    %1014 = vmatprep.subr.mxu0 0.0
    %1015 = vmatpush1.msra.mxu0 0.0
    %1016 = vmatprep.subr.mxu0 0.0
    %1017 = vmatpush1.msra.mxu0 0.0
    %1018 = vmatprep.subr.mxu0 0.0
    %1019 = vmatpush1.msra.mxu0 0.0
    %1020 = vmatprep.subr.mxu0 0.0
    %1021 = vmatpush1.msra.mxu0 0.0
    %1022 = vmatprep.subr.mxu0 0.0
    %1023 = vmatpush1.msra.mxu0 0.0
    %1024 = vmatprep.subr.mxu0 0.0
    %1025 = vmatpush1.msra.mxu0 0.0
    %1026 = vmatprep.subr.mxu0 0.0
    %1027 = vmatpush1.msra.mxu0 0.0
    %1028 = vmatprep.subr.mxu0 0.0
    %1029 = vmatpush1.msra.mxu0 0.0
    %1030 = vmatprep.subr.mxu0 0.0
    %1031 = vmatpush1.msra.mxu0 0.0
    %1032 = vmatprep.subr.mxu0 0.0
    %1033 = vmatpush1.msra.mxu0 0.0
    %1034 = vmatprep.subr.mxu0 0.0
    %1035 = vmatpush1.msra.mxu0 0.0
    %1036 = vmatprep.subr.mxu0 0.0
    %1037 = vmatpush1.msra.mxu0 0.0
    %1038 = vmatprep.subr.mxu0 0.0
    %1039 = vmatpush1.msra.mxu0 0.0
    %1040 = vmatprep.subr.mxu0 0.0
    %1041 = vmatpush1.msra.mxu0 0.0
    %1042 = vmatprep.subr.mxu0 0.0
    %1043 = vmatpush1.msra.mxu0 0.0
    %1044 = vmatprep.subr.mxu0 0.0
    %1045 = vmatpush1.msra.mxu0 0.0
    %1046 = vmatprep.subr.mxu0 0.0
    %1047 = vmatpush1.msra.mxu0 0.0
    %1048 = vmatprep.subr.mxu0 0.0
    %1049 = vmatpush1.msra.mxu0 0.0
    %1050 = vmatprep.subr.mxu0 0.0
    %1051 = vmatpush1.msra.mxu0 0.0
    %1052 = vmatprep.subr.mxu0 0.0
    %1053 = vmatpush1.msra.mxu0 0.0
    %1054 = vmatprep.subr.mxu0 0.0
    %1055 = vmatpush1.msra.mxu0 0.0
    %1056 = vmatprep.subr.mxu0 0.0
    %1057 = vmatpush1.msra.mxu0 0.0
    %1058 = vmatprep.subr.mxu0 0.0
    %1059 = vmatpush1.msra.mxu0 0.0
    %1060 = vmatprep.subr.mxu0 0.0
    %1061 = vmatpush1.msra.mxu0 0.0
    %1062 = vmatprep.subr.mxu0 0.0
    %1063 = vmatpush1.msra.mxu0 0.0
    %1064 = vmatprep.subr.mxu0 0.0
    %1065 = vmatpush1.msra.mxu0 0.0
    %1066 = vmatprep.subr.mxu0 0.0
    %1067 = vmatpush1.msra.mxu0 0.0
    %1068 = vmatprep.subr.mxu0 0.0
    %1069 = vmatpush1.msra.mxu0 0.0
    %1070 = vmatprep.mubr.f32.mxu0 0.0
    %1071 = vmatmul.mubr.f32.gmra.mrb[0].mxu0 %v1004
    %v1072 = vpop.f32.mrb[0].mxu0
    %v1073 = vadd.f32 0.0, %v1072
    %v1074 = vpop.f32.mrb[0].mxu0
    %1075 = vdwg.mxu0
    %1077 = vrot.lane.b32.xlu0 %v741, 8
    %v1078 = vpop.permute.xlu0 %1077
    %1081 = vrot.lane.b32.xlu0 %v907, 16
    %v1082 = vpop.permute.xlu0 %1081
    %1085 = vrot.lane.b32.xlu0 %v1073, 24
    %v1086 = vpop.permute.xlu0 %1085
    %v1088 = vsel %vm415, %v574, %v1078
    %vm1089 = vcmask 130048
    %v1090 = vsel %vm1089, %v1088, %v1082
    %vm1091 = vcmask 195584
    %v1092 = vsel %vm1091, %v1090, %v1086
    %v1094 = vsel %vm415, %v224, 0
    %v1097 = vsel %vm415, %v318, 0
    %1099 = vmatprep.subr.mxu0 0.0
    %1100 = vmatpush1.xpose.msra.mxu0 %v1097
    %1101 = vmatprep.subr.mxu0 0.0
    %1102 = vmatpush1.xpose.msra.mxu0 0.0
    %1103 = vmatprep.subr.mxu0 0.0
    %1104 = vmatpush1.xpose.msra.mxu0 0.0
    %1105 = vmatprep.subr.mxu0 0.0
    %1106 = vmatpush1.xpose.msra.mxu0 0.0
    %1107 = vmatprep.subr.mxu0 0.0
    %1108 = vmatpush1.xpose.msra.mxu0 0.0
    %1109 = vmatprep.subr.mxu0 0.0
    %1110 = vmatpush1.xpose.msra.mxu0 0.0
    %1111 = vmatprep.subr.mxu0 0.0
    %1112 = vmatpush1.xpose.msra.mxu0 0.0
    %1113 = vmatprep.subr.mxu0 0.0
    %1114 = vmatpush1.xpose.msra.mxu0 0.0
    %1115 = vmatprep.subr.mxu0 0.0
    %1116 = vmatpush1.xpose.msra.mxu0 0.0
    %1117 = vmatprep.subr.mxu0 0.0
    %1118 = vmatpush1.xpose.msra.mxu0 0.0
    %1119 = vmatprep.subr.mxu0 0.0
    %1120 = vmatpush1.xpose.msra.mxu0 0.0
    %1121 = vmatprep.subr.mxu0 0.0
    %1122 = vmatpush1.xpose.msra.mxu0 0.0
    %1123 = vmatprep.subr.mxu0 0.0
    %1124 = vmatpush1.xpose.msra.mxu0 0.0
    %1125 = vmatprep.subr.mxu0 0.0
    %1126 = vmatpush1.xpose.msra.mxu0 0.0
    %1127 = vmatprep.subr.mxu0 0.0
    %1128 = vmatpush1.xpose.msra.mxu0 0.0
    %1129 = vmatprep.subr.mxu0 0.0
    %1130 = vmatpush1.xpose.msra.mxu0 0.0
    %1131 = vmatprep.subr.mxu0 0.0
    %1132 = vmatpush1.xpose.msra.mxu0 0.0
    %1133 = vmatprep.subr.mxu0 0.0
    %1134 = vmatpush1.xpose.msra.mxu0 0.0
    %1135 = vmatprep.subr.mxu0 0.0
    %1136 = vmatpush1.xpose.msra.mxu0 0.0
    %1137 = vmatprep.subr.mxu0 0.0
    %1138 = vmatpush1.xpose.msra.mxu0 0.0
    %1139 = vmatprep.subr.mxu0 0.0
    %1140 = vmatpush1.xpose.msra.mxu0 0.0
    %1141 = vmatprep.subr.mxu0 0.0
    %1142 = vmatpush1.xpose.msra.mxu0 0.0
    %1143 = vmatprep.subr.mxu0 0.0
    %1144 = vmatpush1.xpose.msra.mxu0 0.0
    %1145 = vmatprep.subr.mxu0 0.0
    %1146 = vmatpush1.xpose.msra.mxu0 0.0
    %1147 = vmatprep.subr.mxu0 0.0
    %1148 = vmatpush1.xpose.msra.mxu0 0.0
    %1149 = vmatprep.subr.mxu0 0.0
    %1150 = vmatpush1.xpose.msra.mxu0 0.0
    %1151 = vmatprep.subr.mxu0 0.0
    %1152 = vmatpush1.xpose.msra.mxu0 0.0
    %1153 = vmatprep.subr.mxu0 0.0
    %1154 = vmatpush1.xpose.msra.mxu0 0.0
    %1155 = vmatprep.subr.mxu0 0.0
    %1156 = vmatpush1.xpose.msra.mxu0 0.0
    %1157 = vmatprep.subr.mxu0 0.0
    %1158 = vmatpush1.xpose.msra.mxu0 0.0
    %1159 = vmatprep.subr.mxu0 0.0
    %1160 = vmatpush1.xpose.msra.mxu0 0.0
    %1161 = vmatprep.subr.mxu0 0.0
    %1162 = vmatpush1.xpose.msra.mxu0 0.0
    %1163 = vmatprep.mubr.f32.mxu0 0.0
    %1164 = vmatmul.mubr.f32.gmra.mrb[0].mxu0 %v1094
    %v1165 = vpop.f32.mrb[0].mxu0
    %v1166 = vadd.f32 0.0, %v1165
    %v1167 = vpop.f32.mrb[0].mxu0
    %1168 = vdwg.mxu0
    %v1169 = vmul.f32 %v1166, 0.35355338
    %v1170 = vsel %vm415, %v1169, -inf
    %1171 = vmax.xlane.f32.xlu0 %v1170
    %v1172 = vpop.xlane.xlu0 %1171
    %v1173 = vsub.f32 %v1169, %v1172
    %v1174 = vmul.f32 %v1173, 1.442695
    %v1175 = vpow.pop %v1174
    %v1176 = vsel %vm415, %v1175, 0.0
    %1177 = vadd.xlane.f32.xlu0 %v1176
    %v1178 = vpop.xlane.xlu0 %1177
    %v1179 = vrcp.pop %v1178
    %v1180 = vmul.f32 %v1175, %v1179
    %v1182 = vsel %vm415, %v1180, 0
    %1184 = vmatprep.subr.mxu0 0.0
    %1185 = vmatpush1.msra.mxu0 %v412
    %1186 = vmatprep.subr.mxu0 0.0
    %1187 = vmatpush1.msra.mxu0 0.0
    %1188 = vmatprep.subr.mxu0 0.0
    %1189 = vmatpush1.msra.mxu0 0.0
    %1190 = vmatprep.subr.mxu0 0.0
    %1191 = vmatpush1.msra.mxu0 0.0
    %1192 = vmatprep.subr.mxu0 0.0
    %1193 = vmatpush1.msra.mxu0 0.0
    %1194 = vmatprep.subr.mxu0 0.0
    %1195 = vmatpush1.msra.mxu0 0.0
    %1196 = vmatprep.subr.mxu0 0.0
    %1197 = vmatpush1.msra.mxu0 0.0
    %1198 = vmatprep.subr.mxu0 0.0
    %1199 = vmatpush1.msra.mxu0 0.0
    %1200 = vmatprep.subr.mxu0 0.0
    %1201 = vmatpush1.msra.mxu0 0.0
    %1202 = vmatprep.subr.mxu0 0.0
    %1203 = vmatpush1.msra.mxu0 0.0
    %1204 = vmatprep.subr.mxu0 0.0
    %1205 = vmatpush1.msra.mxu0 0.0
    %1206 = vmatprep.subr.mxu0 0.0
    %1207 = vmatpush1.msra.mxu0 0.0
    %1208 = vmatprep.subr.mxu0 0.0
    %1209 = vmatpush1.msra.mxu0 0.0
    %1210 = vmatprep.subr.mxu0 0.0
    %1211 = vmatpush1.msra.mxu0 0.0
    %1212 = vmatprep.subr.mxu0 0.0
    %1213 = vmatpush1.msra.mxu0 0.0
    %1214 = vmatprep.subr.mxu0 0.0
    %1215 = vmatpush1.msra.mxu0 0.0
    %1216 = vmatprep.subr.mxu0 0.0
    %1217 = vmatpush1.msra.mxu0 0.0
    %1218 = vmatprep.subr.mxu0 0.0
    %1219 = vmatpush1.msra.mxu0 0.0
    %1220 = vmatprep.subr.mxu0 0.0
    %1221 = vmatpush1.msra.mxu0 0.0
    %1222 = vmatprep.subr.mxu0 0.0
    %1223 = vmatpush1.msra.mxu0 0.0
    %1224 = vmatprep.subr.mxu0 0.0
    %1225 = vmatpush1.msra.mxu0 0.0
    %1226 = vmatprep.subr.mxu0 0.0
    %1227 = vmatpush1.msra.mxu0 0.0
    %1228 = vmatprep.subr.mxu0 0.0
    %1229 = vmatpush1.msra.mxu0 0.0
    %1230 = vmatprep.subr.mxu0 0.0
    %1231 = vmatpush1.msra.mxu0 0.0
    %1232 = vmatprep.subr.mxu0 0.0
    %1233 = vmatpush1.msra.mxu0 0.0
    %1234 = vmatprep.subr.mxu0 0.0
    %1235 = vmatpush1.msra.mxu0 0.0
    %1236 = vmatprep.subr.mxu0 0.0
    %1237 = vmatpush1.msra.mxu0 0.0
    %1238 = vmatprep.subr.mxu0 0.0
    %1239 = vmatpush1.msra.mxu0 0.0
    %1240 = vmatprep.subr.mxu0 0.0
    %1241 = vmatpush1.msra.mxu0 0.0
    %1242 = vmatprep.subr.mxu0 0.0
    %1243 = vmatpush1.msra.mxu0 0.0
    %1244 = vmatprep.subr.mxu0 0.0
    %1245 = vmatpush1.msra.mxu0 0.0
    %1246 = vmatprep.subr.mxu0 0.0
    %1247 = vmatpush1.msra.mxu0 0.0
    %1248 = vmatprep.mubr.f32.mxu0 0.0
    %1249 = vmatmul.mubr.f32.gmra.mrb[0].mxu0 %v1182
    %v1250 = vpop.f32.mrb[0].mxu0
    %v1251 = vadd.f32 0.0, %v1250
    %v1252 = vpop.f32.mrb[0].mxu0
    %1253 = vdwg.mxu0
    %1254 = vrot.lane.b32.xlu0 %v224, 120
    %v1255 = vpop.permute.xlu0 %1254
    %1256 = vrot.lane.b32.xlu0 %v318, 120
    %v1257 = vpop.permute.xlu0 %1256
    %v1258 = vsel %vm415, %v1255, 0
    %v1260 = vsel %vm415, %v1257, 0
    %1262 = vmatprep.subr.mxu0 0.0
    %1263 = vmatpush1.xpose.msra.mxu0 %v1260
    %1264 = vmatprep.subr.mxu0 0.0
    %1265 = vmatpush1.xpose.msra.mxu0 0.0
    %1266 = vmatprep.subr.mxu0 0.0
    %1267 = vmatpush1.xpose.msra.mxu0 0.0
    %1268 = vmatprep.subr.mxu0 0.0
    %1269 = vmatpush1.xpose.msra.mxu0 0.0
    %1270 = vmatprep.subr.mxu0 0.0
    %1271 = vmatpush1.xpose.msra.mxu0 0.0
    %1272 = vmatprep.subr.mxu0 0.0
    %1273 = vmatpush1.xpose.msra.mxu0 0.0
    %1274 = vmatprep.subr.mxu0 0.0
    %1275 = vmatpush1.xpose.msra.mxu0 0.0
    %1276 = vmatprep.subr.mxu0 0.0
    %1277 = vmatpush1.xpose.msra.mxu0 0.0
    %1278 = vmatprep.subr.mxu0 0.0
    %1279 = vmatpush1.xpose.msra.mxu0 0.0
    %1280 = vmatprep.subr.mxu0 0.0
    %1281 = vmatpush1.xpose.msra.mxu0 0.0
    %1282 = vmatprep.subr.mxu0 0.0
    %1283 = vmatpush1.xpose.msra.mxu0 0.0
    %1284 = vmatprep.subr.mxu0 0.0
    %1285 = vmatpush1.xpose.msra.mxu0 0.0
    %1286 = vmatprep.subr.mxu0 0.0
    %1287 = vmatpush1.xpose.msra.mxu0 0.0
    %1288 = vmatprep.subr.mxu0 0.0
    %1289 = vmatpush1.xpose.msra.mxu0 0.0
    %1290 = vmatprep.subr.mxu0 0.0
    %1291 = vmatpush1.xpose.msra.mxu0 0.0
    %1292 = vmatprep.subr.mxu0 0.0
    %1293 = vmatpush1.xpose.msra.mxu0 0.0
    %1294 = vmatprep.subr.mxu0 0.0
    %1295 = vmatpush1.xpose.msra.mxu0 0.0
    %1296 = vmatprep.subr.mxu0 0.0
    %1297 = vmatpush1.xpose.msra.mxu0 0.0
    %1298 = vmatprep.subr.mxu0 0.0
    %1299 = vmatpush1.xpose.msra.mxu0 0.0
    %1300 = vmatprep.subr.mxu0 0.0
    %1301 = vmatpush1.xpose.msra.mxu0 0.0
    %1302 = vmatprep.subr.mxu0 0.0
    %1303 = vmatpush1.xpose.msra.mxu0 0.0
    %1304 = vmatprep.subr.mxu0 0.0
    %1305 = vmatpush1.xpose.msra.mxu0 0.0
    %1306 = vmatprep.subr.mxu0 0.0
    %1307 = vmatpush1.xpose.msra.mxu0 0.0
    %1308 = vmatprep.subr.mxu0 0.0
    %1309 = vmatpush1.xpose.msra.mxu0 0.0
    %1310 = vmatprep.subr.mxu0 0.0
    %1311 = vmatpush1.xpose.msra.mxu0 0.0
    %1312 = vmatprep.subr.mxu0 0.0
    %1313 = vmatpush1.xpose.msra.mxu0 0.0
    %1314 = vmatprep.subr.mxu0 0.0
    %1315 = vmatpush1.xpose.msra.mxu0 0.0
    %1316 = vmatprep.subr.mxu0 0.0
    %1317 = vmatpush1.xpose.msra.mxu0 0.0
    %1318 = vmatprep.subr.mxu0 0.0
    %1319 = vmatpush1.xpose.msra.mxu0 0.0
    %1320 = vmatprep.subr.mxu0 0.0
    %1321 = vmatpush1.xpose.msra.mxu0 0.0
    %1322 = vmatprep.subr.mxu0 0.0
    %1323 = vmatpush1.xpose.msra.mxu0 0.0
    %1324 = vmatprep.subr.mxu0 0.0
    %1325 = vmatpush1.xpose.msra.mxu0 0.0
    %1326 = vmatprep.mubr.f32.mxu0 0.0
    %1327 = vmatmul.mubr.f32.gmra.mrb[0].mxu0 %v1258
    %v1328 = vpop.f32.mrb[0].mxu0
    %v1329 = vadd.f32 0.0, %v1328
    %v1330 = vpop.f32.mrb[0].mxu0
    %1331 = vdwg.mxu0
    %v1332 = vmul.f32 %v1329, 0.35355338
    %v1333 = vsel %vm415, %v1332, -inf
    %1334 = vmax.xlane.f32.xlu0 %v1333
    %v1335 = vpop.xlane.xlu0 %1334
    %v1336 = vsub.f32 %v1332, %v1335
    %v1337 = vmul.f32 %v1336, 1.442695
    %v1338 = vpow.pop %v1337
    %v1339 = vsel %vm415, %v1338, 0.0
    %1340 = vadd.xlane.f32.xlu0 %v1339
    %v1341 = vpop.xlane.xlu0 %1340
    %v1342 = vrcp.pop %v1341
    %v1343 = vmul.f32 %v1338, %v1342
    %1345 = vrot.lane.b32.xlu0 %v412, 120
    %v1346 = vpop.permute.xlu0 %1345
    %v1349 = vsel %vm415, %v1343, 0
    %1351 = vmatprep.subr.mxu0 0.0
    %1352 = vmatpush1.msra.mxu0 %v1346
    %1353 = vmatprep.subr.mxu0 0.0
    %1354 = vmatpush1.msra.mxu0 0.0
    %1355 = vmatprep.subr.mxu0 0.0
    %1356 = vmatpush1.msra.mxu0 0.0
    %1357 = vmatprep.subr.mxu0 0.0
    %1358 = vmatpush1.msra.mxu0 0.0
    %1359 = vmatprep.subr.mxu0 0.0
    %1360 = vmatpush1.msra.mxu0 0.0
    %1361 = vmatprep.subr.mxu0 0.0
    %1362 = vmatpush1.msra.mxu0 0.0
    %1363 = vmatprep.subr.mxu0 0.0
    %1364 = vmatpush1.msra.mxu0 0.0
    %1365 = vmatprep.subr.mxu0 0.0
    %1366 = vmatpush1.msra.mxu0 0.0
    %1367 = vmatprep.subr.mxu0 0.0
    %1368 = vmatpush1.msra.mxu0 0.0
    %1369 = vmatprep.subr.mxu0 0.0
    %1370 = vmatpush1.msra.mxu0 0.0
    %1371 = vmatprep.subr.mxu0 0.0
    %1372 = vmatpush1.msra.mxu0 0.0
    %1373 = vmatprep.subr.mxu0 0.0
    %1374 = vmatpush1.msra.mxu0 0.0
    %1375 = vmatprep.subr.mxu0 0.0
    %1376 = vmatpush1.msra.mxu0 0.0
    %1377 = vmatprep.subr.mxu0 0.0
    %1378 = vmatpush1.msra.mxu0 0.0
    %1379 = vmatprep.subr.mxu0 0.0
    %1380 = vmatpush1.msra.mxu0 0.0
    %1381 = vmatprep.subr.mxu0 0.0
    %1382 = vmatpush1.msra.mxu0 0.0
    %1383 = vmatprep.subr.mxu0 0.0
    %1384 = vmatpush1.msra.mxu0 0.0
    %1385 = vmatprep.subr.mxu0 0.0
    %1386 = vmatpush1.msra.mxu0 0.0
    %1387 = vmatprep.subr.mxu0 0.0
    %1388 = vmatpush1.msra.mxu0 0.0
    %1389 = vmatprep.subr.mxu0 0.0
    %1390 = vmatpush1.msra.mxu0 0.0
    %1391 = vmatprep.subr.mxu0 0.0
    %1392 = vmatpush1.msra.mxu0 0.0
    %1393 = vmatprep.subr.mxu0 0.0
    %1394 = vmatpush1.msra.mxu0 0.0
    %1395 = vmatprep.subr.mxu0 0.0
    %1396 = vmatpush1.msra.mxu0 0.0
    %1397 = vmatprep.subr.mxu0 0.0
    %1398 = vmatpush1.msra.mxu0 0.0
    %1399 = vmatprep.subr.mxu0 0.0
    %1400 = vmatpush1.msra.mxu0 0.0
    %1401 = vmatprep.subr.mxu0 0.0
    %1402 = vmatpush1.msra.mxu0 0.0
    %1403 = vmatprep.subr.mxu0 0.0
    %1404 = vmatpush1.msra.mxu0 0.0
    %1405 = vmatprep.subr.mxu0 0.0
    %1406 = vmatpush1.msra.mxu0 0.0
    %1407 = vmatprep.subr.mxu0 0.0
    %1408 = vmatpush1.msra.mxu0 0.0
    %1409 = vmatprep.subr.mxu0 0.0
    %1410 = vmatpush1.msra.mxu0 0.0
    %1411 = vmatprep.subr.mxu0 0.0
    %1412 = vmatpush1.msra.mxu0 0.0
    %1413 = vmatprep.subr.mxu0 0.0
    %1414 = vmatpush1.msra.mxu0 0.0
    %1415 = vmatprep.mubr.f32.mxu0 0.0
    %1416 = vmatmul.mubr.f32.gmra.mrb[0].mxu0 %v1349
    %v1417 = vpop.f32.mrb[0].mxu0
    %v1418 = vadd.f32 0.0, %v1417
    %v1419 = vpop.f32.mrb[0].mxu0
    %1420 = vdwg.mxu0
    %1421 = vrot.lane.b32.xlu0 %v224, 112
    %v1422 = vpop.permute.xlu0 %1421
    %1423 = vrot.lane.b32.xlu0 %v318, 112
    %v1424 = vpop.permute.xlu0 %1423
    %v1425 = vsel %vm415, %v1422, 0
    %v1427 = vsel %vm415, %v1424, 0
    %1429 = vmatprep.subr.mxu0 0.0
    %1430 = vmatpush1.xpose.msra.mxu0 %v1427
    %1431 = vmatprep.subr.mxu0 0.0
    %1432 = vmatpush1.xpose.msra.mxu0 0.0
    %1433 = vmatprep.subr.mxu0 0.0
    %1434 = vmatpush1.xpose.msra.mxu0 0.0
    %1435 = vmatprep.subr.mxu0 0.0
    %1436 = vmatpush1.xpose.msra.mxu0 0.0
    %1437 = vmatprep.subr.mxu0 0.0
    %1438 = vmatpush1.xpose.msra.mxu0 0.0
    %1439 = vmatprep.subr.mxu0 0.0
    %1440 = vmatpush1.xpose.msra.mxu0 0.0
    %1441 = vmatprep.subr.mxu0 0.0
    %1442 = vmatpush1.xpose.msra.mxu0 0.0
    %1443 = vmatprep.subr.mxu0 0.0
    %1444 = vmatpush1.xpose.msra.mxu0 0.0
    %1445 = vmatprep.subr.mxu0 0.0
    %1446 = vmatpush1.xpose.msra.mxu0 0.0
    %1447 = vmatprep.subr.mxu0 0.0
    %1448 = vmatpush1.xpose.msra.mxu0 0.0
    %1449 = vmatprep.subr.mxu0 0.0
    %1450 = vmatpush1.xpose.msra.mxu0 0.0
    %1451 = vmatprep.subr.mxu0 0.0
    %1452 = vmatpush1.xpose.msra.mxu0 0.0
    %1453 = vmatprep.subr.mxu0 0.0
    %1454 = vmatpush1.xpose.msra.mxu0 0.0
    %1455 = vmatprep.subr.mxu0 0.0
    %1456 = vmatpush1.xpose.msra.mxu0 0.0
    %1457 = vmatprep.subr.mxu0 0.0
    %1458 = vmatpush1.xpose.msra.mxu0 0.0
    %1459 = vmatprep.subr.mxu0 0.0
    %1460 = vmatpush1.xpose.msra.mxu0 0.0
    %1461 = vmatprep.subr.mxu0 0.0
    %1462 = vmatpush1.xpose.msra.mxu0 0.0
    %1463 = vmatprep.subr.mxu0 0.0
    %1464 = vmatpush1.xpose.msra.mxu0 0.0
    %1465 = vmatprep.subr.mxu0 0.0
    %1466 = vmatpush1.xpose.msra.mxu0 0.0
    %1467 = vmatprep.subr.mxu0 0.0
    %1468 = vmatpush1.xpose.msra.mxu0 0.0
    %1469 = vmatprep.subr.mxu0 0.0
    %1470 = vmatpush1.xpose.msra.mxu0 0.0
    %1471 = vmatprep.subr.mxu0 0.0
    %1472 = vmatpush1.xpose.msra.mxu0 0.0
    %1473 = vmatprep.subr.mxu0 0.0
    %1474 = vmatpush1.xpose.msra.mxu0 0.0
    %1475 = vmatprep.subr.mxu0 0.0
    %1476 = vmatpush1.xpose.msra.mxu0 0.0
    %1477 = vmatprep.subr.mxu0 0.0
    %1478 = vmatpush1.xpose.msra.mxu0 0.0
    %1479 = vmatprep.subr.mxu0 0.0
    %1480 = vmatpush1.xpose.msra.mxu0 0.0
    %1481 = vmatprep.subr.mxu0 0.0
    %1482 = vmatpush1.xpose.msra.mxu0 0.0
    %1483 = vmatprep.subr.mxu0 0.0
    %1484 = vmatpush1.xpose.msra.mxu0 0.0
    %1485 = vmatprep.subr.mxu0 0.0
    %1486 = vmatpush1.xpose.msra.mxu0 0.0
    %1487 = vmatprep.subr.mxu0 0.0
    %1488 = vmatpush1.xpose.msra.mxu0 0.0
    %1489 = vmatprep.subr.mxu0 0.0
    %1490 = vmatpush1.xpose.msra.mxu0 0.0
    %1491 = vmatprep.subr.mxu0 0.0
    %1492 = vmatpush1.xpose.msra.mxu0 0.0
    %1493 = vmatprep.mubr.f32.mxu0 0.0
    %1494 = vmatmul.mubr.f32.gmra.mrb[0].mxu0 %v1425
    %v1495 = vpop.f32.mrb[0].mxu0
    %v1496 = vadd.f32 0.0, %v1495
    %v1497 = vpop.f32.mrb[0].mxu0
    %1498 = vdwg.mxu0
    %v1499 = vmul.f32 %v1496, 0.35355338
    %v1500 = vsel %vm415, %v1499, -inf
    %1501 = vmax.xlane.f32.xlu0 %v1500
    %v1502 = vpop.xlane.xlu0 %1501
    %v1503 = vsub.f32 %v1499, %v1502
    %v1504 = vmul.f32 %v1503, 1.442695
    %v1505 = vpow.pop %v1504
    %v1506 = vsel %vm415, %v1505, 0.0
    %1507 = vadd.xlane.f32.xlu0 %v1506
    %v1508 = vpop.xlane.xlu0 %1507
    %v1509 = vrcp.pop %v1508
    %v1510 = vmul.f32 %v1505, %v1509
    %1511 = vrot.lane.b32.xlu0 %v412, 112
    %v1512 = vpop.permute.xlu0 %1511
    %v1515 = vsel %vm415, %v1510, 0
    %1517 = vmatprep.subr.mxu0 0.0
    %1518 = vmatpush1.msra.mxu0 %v1512
    %1519 = vmatprep.subr.mxu0 0.0
    %1520 = vmatpush1.msra.mxu0 0.0
    %1521 = vmatprep.subr.mxu0 0.0
    %1522 = vmatpush1.msra.mxu0 0.0
    %1523 = vmatprep.subr.mxu0 0.0
    %1524 = vmatpush1.msra.mxu0 0.0
    %1525 = vmatprep.subr.mxu0 0.0
    %1526 = vmatpush1.msra.mxu0 0.0
    %1527 = vmatprep.subr.mxu0 0.0
    %1528 = vmatpush1.msra.mxu0 0.0
    %1529 = vmatprep.subr.mxu0 0.0
    %1530 = vmatpush1.msra.mxu0 0.0
    %1531 = vmatprep.subr.mxu0 0.0
    %1532 = vmatpush1.msra.mxu0 0.0
    %1533 = vmatprep.subr.mxu0 0.0
    %1534 = vmatpush1.msra.mxu0 0.0
    %1535 = vmatprep.subr.mxu0 0.0
    %1536 = vmatpush1.msra.mxu0 0.0
    %1537 = vmatprep.subr.mxu0 0.0
    %1538 = vmatpush1.msra.mxu0 0.0
    %1539 = vmatprep.subr.mxu0 0.0
    %1540 = vmatpush1.msra.mxu0 0.0
    %1541 = vmatprep.subr.mxu0 0.0
    %1542 = vmatpush1.msra.mxu0 0.0
    %1543 = vmatprep.subr.mxu0 0.0
    %1544 = vmatpush1.msra.mxu0 0.0
    %1545 = vmatprep.subr.mxu0 0.0
    %1546 = vmatpush1.msra.mxu0 0.0
    %1547 = vmatprep.subr.mxu0 0.0
    %1548 = vmatpush1.msra.mxu0 0.0
    %1549 = vmatprep.subr.mxu0 0.0
    %1550 = vmatpush1.msra.mxu0 0.0
    %1551 = vmatprep.subr.mxu0 0.0
    %1552 = vmatpush1.msra.mxu0 0.0
    %1553 = vmatprep.subr.mxu0 0.0
    %1554 = vmatpush1.msra.mxu0 0.0
    %1555 = vmatprep.subr.mxu0 0.0
    %1556 = vmatpush1.msra.mxu0 0.0
    %1557 = vmatprep.subr.mxu0 0.0
    %1558 = vmatpush1.msra.mxu0 0.0
    %1559 = vmatprep.subr.mxu0 0.0
    %1560 = vmatpush1.msra.mxu0 0.0
    %1561 = vmatprep.subr.mxu0 0.0
    %1562 = vmatpush1.msra.mxu0 0.0
    %1563 = vmatprep.subr.mxu0 0.0
    %1564 = vmatpush1.msra.mxu0 0.0
    %1565 = vmatprep.subr.mxu0 0.0
    %1566 = vmatpush1.msra.mxu0 0.0
    %1567 = vmatprep.subr.mxu0 0.0
    %1568 = vmatpush1.msra.mxu0 0.0
    %1569 = vmatprep.subr.mxu0 0.0
    %1570 = vmatpush1.msra.mxu0 0.0
    %1571 = vmatprep.subr.mxu0 0.0
    %1572 = vmatpush1.msra.mxu0 0.0
    %1573 = vmatprep.subr.mxu0 0.0
    %1574 = vmatpush1.msra.mxu0 0.0
    %1575 = vmatprep.subr.mxu0 0.0
    %1576 = vmatpush1.msra.mxu0 0.0
    %1577 = vmatprep.subr.mxu0 0.0
    %1578 = vmatpush1.msra.mxu0 0.0
    %1579 = vmatprep.subr.mxu0 0.0
    %1580 = vmatpush1.msra.mxu0 0.0
    %1581 = vmatprep.mubr.f32.mxu0 0.0
    %1582 = vmatmul.mubr.f32.gmra.mrb[0].mxu0 %v1515
    %v1583 = vpop.f32.mrb[0].mxu0
    %v1584 = vadd.f32 0.0, %v1583
    %v1585 = vpop.f32.mrb[0].mxu0
    %1586 = vdwg.mxu0
    %1587 = vrot.lane.b32.xlu0 %v224, 104
    %v1588 = vpop.permute.xlu0 %1587
    %1589 = vrot.lane.b32.xlu0 %v318, 104
    %v1590 = vpop.permute.xlu0 %1589
    %v1591 = vsel %vm415, %v1588, 0
    %v1593 = vsel %vm415, %v1590, 0
    %1595 = vmatprep.subr.mxu0 0.0
    %1596 = vmatpush1.xpose.msra.mxu0 %v1593
    %1597 = vmatprep.subr.mxu0 0.0
    %1598 = vmatpush1.xpose.msra.mxu0 0.0
    %1599 = vmatprep.subr.mxu0 0.0
    %1600 = vmatpush1.xpose.msra.mxu0 0.0
    %1601 = vmatprep.subr.mxu0 0.0
    %1602 = vmatpush1.xpose.msra.mxu0 0.0
    %1603 = vmatprep.subr.mxu0 0.0
    %1604 = vmatpush1.xpose.msra.mxu0 0.0
    %1605 = vmatprep.subr.mxu0 0.0
    %1606 = vmatpush1.xpose.msra.mxu0 0.0
    %1607 = vmatprep.subr.mxu0 0.0
    %1608 = vmatpush1.xpose.msra.mxu0 0.0
    %1609 = vmatprep.subr.mxu0 0.0
    %1610 = vmatpush1.xpose.msra.mxu0 0.0
    %1611 = vmatprep.subr.mxu0 0.0
    %1612 = vmatpush1.xpose.msra.mxu0 0.0
    %1613 = vmatprep.subr.mxu0 0.0
    %1614 = vmatpush1.xpose.msra.mxu0 0.0
    %1615 = vmatprep.subr.mxu0 0.0
    %1616 = vmatpush1.xpose.msra.mxu0 0.0
    %1617 = vmatprep.subr.mxu0 0.0
    %1618 = vmatpush1.xpose.msra.mxu0 0.0
    %1619 = vmatprep.subr.mxu0 0.0
    %1620 = vmatpush1.xpose.msra.mxu0 0.0
    %1621 = vmatprep.subr.mxu0 0.0
    %1622 = vmatpush1.xpose.msra.mxu0 0.0
    %1623 = vmatprep.subr.mxu0 0.0
    %1624 = vmatpush1.xpose.msra.mxu0 0.0
    %1625 = vmatprep.subr.mxu0 0.0
    %1626 = vmatpush1.xpose.msra.mxu0 0.0
    %1627 = vmatprep.subr.mxu0 0.0
    %1628 = vmatpush1.xpose.msra.mxu0 0.0
    %1629 = vmatprep.subr.mxu0 0.0
    %1630 = vmatpush1.xpose.msra.mxu0 0.0
    %1631 = vmatprep.subr.mxu0 0.0
    %1632 = vmatpush1.xpose.msra.mxu0 0.0
    %1633 = vmatprep.subr.mxu0 0.0
    %1634 = vmatpush1.xpose.msra.mxu0 0.0
    %1635 = vmatprep.subr.mxu0 0.0
    %1636 = vmatpush1.xpose.msra.mxu0 0.0
    %1637 = vmatprep.subr.mxu0 0.0
    %1638 = vmatpush1.xpose.msra.mxu0 0.0
    %1639 = vmatprep.subr.mxu0 0.0
    %1640 = vmatpush1.xpose.msra.mxu0 0.0
    %1641 = vmatprep.subr.mxu0 0.0
    %1642 = vmatpush1.xpose.msra.mxu0 0.0
    %1643 = vmatprep.subr.mxu0 0.0
    %1644 = vmatpush1.xpose.msra.mxu0 0.0
    %1645 = vmatprep.subr.mxu0 0.0
    %1646 = vmatpush1.xpose.msra.mxu0 0.0
    %1647 = vmatprep.subr.mxu0 0.0
    %1648 = vmatpush1.xpose.msra.mxu0 0.0
    %1649 = vmatprep.subr.mxu0 0.0
    %1650 = vmatpush1.xpose.msra.mxu0 0.0
    %1651 = vmatprep.subr.mxu0 0.0
    %1652 = vmatpush1.xpose.msra.mxu0 0.0
    %1653 = vmatprep.subr.mxu0 0.0
    %1654 = vmatpush1.xpose.msra.mxu0 0.0
    %1655 = vmatprep.subr.mxu0 0.0
    %1656 = vmatpush1.xpose.msra.mxu0 0.0
    %1657 = vmatprep.subr.mxu0 0.0
    %1658 = vmatpush1.xpose.msra.mxu0 0.0
    %1659 = vmatprep.mubr.f32.mxu0 0.0
    %1660 = vmatmul.mubr.f32.gmra.mrb[0].mxu0 %v1591
    %v1661 = vpop.f32.mrb[0].mxu0
    %v1662 = vadd.f32 0.0, %v1661
    %v1663 = vpop.f32.mrb[0].mxu0
    %1664 = vdwg.mxu0
    %v1665 = vmul.f32 %v1662, 0.35355338
    %v1666 = vsel %vm415, %v1665, -inf
    %1667 = vmax.xlane.f32.xlu0 %v1666
    %v1668 = vpop.xlane.xlu0 %1667
    %v1669 = vsub.f32 %v1665, %v1668
    %v1670 = vmul.f32 %v1669, 1.442695
    %v1671 = vpow.pop %v1670
    %v1672 = vsel %vm415, %v1671, 0.0
    %1673 = vadd.xlane.f32.xlu0 %v1672
    %v1674 = vpop.xlane.xlu0 %1673
    %v1675 = vrcp.pop %v1674
    %v1676 = vmul.f32 %v1671, %v1675
    %1677 = vrot.lane.b32.xlu0 %v412, 104
    %v1678 = vpop.permute.xlu0 %1677
    %v1681 = vsel %vm415, %v1676, 0
    %1683 = vmatprep.subr.mxu0 0.0
    %1684 = vmatpush1.msra.mxu0 %v1678
    %1685 = vmatprep.subr.mxu0 0.0
    %1686 = vmatpush1.msra.mxu0 0.0
    %1687 = vmatprep.subr.mxu0 0.0
    %1688 = vmatpush1.msra.mxu0 0.0
    %1689 = vmatprep.subr.mxu0 0.0
    %1690 = vmatpush1.msra.mxu0 0.0
    %1691 = vmatprep.subr.mxu0 0.0
    %1692 = vmatpush1.msra.mxu0 0.0
    %1693 = vmatprep.subr.mxu0 0.0
    %1694 = vmatpush1.msra.mxu0 0.0
    %1695 = vmatprep.subr.mxu0 0.0
    %1696 = vmatpush1.msra.mxu0 0.0
    %1697 = vmatprep.subr.mxu0 0.0
    %1698 = vmatpush1.msra.mxu0 0.0
    %1699 = vmatprep.subr.mxu0 0.0
    %1700 = vmatpush1.msra.mxu0 0.0
    %1701 = vmatprep.subr.mxu0 0.0
    %1702 = vmatpush1.msra.mxu0 0.0
    %1703 = vmatprep.subr.mxu0 0.0
    %1704 = vmatpush1.msra.mxu0 0.0
    %1705 = vmatprep.subr.mxu0 0.0
    %1706 = vmatpush1.msra.mxu0 0.0
    %1707 = vmatprep.subr.mxu0 0.0
    %1708 = vmatpush1.msra.mxu0 0.0
    %1709 = vmatprep.subr.mxu0 0.0
    %1710 = vmatpush1.msra.mxu0 0.0
    %1711 = vmatprep.subr.mxu0 0.0
    %1712 = vmatpush1.msra.mxu0 0.0
    %1713 = vmatprep.subr.mxu0 0.0
    %1714 = vmatpush1.msra.mxu0 0.0
    %1715 = vmatprep.subr.mxu0 0.0
    %1716 = vmatpush1.msra.mxu0 0.0
    %1717 = vmatprep.subr.mxu0 0.0
    %1718 = vmatpush1.msra.mxu0 0.0
    %1719 = vmatprep.subr.mxu0 0.0
    %1720 = vmatpush1.msra.mxu0 0.0
    %1721 = vmatprep.subr.mxu0 0.0
    %1722 = vmatpush1.msra.mxu0 0.0
    %1723 = vmatprep.subr.mxu0 0.0
    %1724 = vmatpush1.msra.mxu0 0.0
    %1725 = vmatprep.subr.mxu0 0.0
    %1726 = vmatpush1.msra.mxu0 0.0
    %1727 = vmatprep.subr.mxu0 0.0
    %1728 = vmatpush1.msra.mxu0 0.0
    %1729 = vmatprep.subr.mxu0 0.0
    %1730 = vmatpush1.msra.mxu0 0.0
    %1731 = vmatprep.subr.mxu0 0.0
    %1732 = vmatpush1.msra.mxu0 0.0
    %1733 = vmatprep.subr.mxu0 0.0
    %1734 = vmatpush1.msra.mxu0 0.0
    %1735 = vmatprep.subr.mxu0 0.0
    %1736 = vmatpush1.msra.mxu0 0.0
    %1737 = vmatprep.subr.mxu0 0.0
    %1738 = vmatpush1.msra.mxu0 0.0
    %1739 = vmatprep.subr.mxu0 0.0
    %1740 = vmatpush1.msra.mxu0 0.0
    %1741 = vmatprep.subr.mxu0 0.0
    %1742 = vmatpush1.msra.mxu0 0.0
    %1743 = vmatprep.subr.mxu0 0.0
    %1744 = vmatpush1.msra.mxu0 0.0
    %1745 = vmatprep.subr.mxu0 0.0
    %1746 = vmatpush1.msra.mxu0 0.0
    %1747 = vmatprep.mubr.f32.mxu0 0.0
    %1748 = vmatmul.mubr.f32.gmra.mrb[0].mxu0 %v1681
    %v1749 = vpop.f32.mrb[0].mxu0
    %v1750 = vadd.f32 0.0, %v1749
    %v1751 = vpop.f32.mrb[0].mxu0
    %1752 = vdwg.mxu0
    %1754 = vrot.lane.b32.xlu0 %v1418, 8
    %v1755 = vpop.permute.xlu0 %1754
    %1758 = vrot.lane.b32.xlu0 %v1584, 16
    %v1759 = vpop.permute.xlu0 %1758
    %1762 = vrot.lane.b32.xlu0 %v1750, 24
    %v1763 = vpop.permute.xlu0 %1762
    %v1765 = vsel %vm415, %v1251, %v1755
    %v1766 = vsel %vm1089, %v1765, %v1759
    %v1767 = vsel %vm1091, %v1766, %v1763
    %v1768 = vld [vmem:[%s9] sm:$0xff]
    %v1769 = vld [vmem:[%s9 + $0x8] sm:$0xff]
    %v1770 = vld [vmem:[%s9 + $0x10] sm:$0xff]
    %v1771 = vld [vmem:[%s9 + $0x18] sm:$0xff]
    %v1772 = vld [vmem:[%s10] sm:$0x1]
    %v1774 = vlaneseq
    %v1775 = vshrl.u32 %v1774, 7
    %v1776 = vsub.s32 0, %v1775
    %v1777 = vrot.slane %v1772, %v1776
    %v1780 = vsel %vm145, %v1092, 0
    %v1783 = vsel %vm145, %v1767, 0
    %1785 = vmatprep.subr.mxu0 0.0
    %1786 = vmatpush1.msra.mxu0 %v1768
    %1787 = vmatprep.subr.mxu0 0.0
    %1788 = vmatpush1.msra.mxu0 %v1769
    %1789 = vmatprep.subr.mxu0 0.0
    %1790 = vmatpush1.msra.mxu0 %v1770
    %1791 = vmatprep.subr.mxu0 0.0
    %1792 = vmatpush1.msra.mxu0 %v1771
    %1793 = vmatprep.subr.mxu0 0.0
    %1794 = vmatpush1.msra.mxu0 0.0
    %1795 = vmatprep.subr.mxu0 0.0
    %1796 = vmatpush1.msra.mxu0 0.0
    %1797 = vmatprep.subr.mxu0 0.0
    %1798 = vmatpush1.msra.mxu0 0.0
    %1799 = vmatprep.subr.mxu0 0.0
    %1800 = vmatpush1.msra.mxu0 0.0
    %1801 = vmatprep.subr.mxu0 0.0
    %1802 = vmatpush1.msra.mxu0 0.0
    %1803 = vmatprep.subr.mxu0 0.0
    %1804 = vmatpush1.msra.mxu0 0.0
    %1805 = vmatprep.subr.mxu0 0.0
    %1806 = vmatpush1.msra.mxu0 0.0
    %1807 = vmatprep.subr.mxu0 0.0
    %1808 = vmatpush1.msra.mxu0 0.0
    %1809 = vmatprep.subr.mxu0 0.0
    %1810 = vmatpush1.msra.mxu0 0.0
    %1811 = vmatprep.subr.mxu0 0.0
    %1812 = vmatpush1.msra.mxu0 0.0
    %1813 = vmatprep.subr.mxu0 0.0
    %1814 = vmatpush1.msra.mxu0 0.0
    %1815 = vmatprep.subr.mxu0 0.0
    %1816 = vmatpush1.msra.mxu0 0.0
    %1817 = vmatprep.subr.mxu0 0.0
    %1818 = vmatpush1.msra.mxu0 0.0
    %1819 = vmatprep.subr.mxu0 0.0
    %1820 = vmatpush1.msra.mxu0 0.0
    %1821 = vmatprep.subr.mxu0 0.0
    %1822 = vmatpush1.msra.mxu0 0.0
    %1823 = vmatprep.subr.mxu0 0.0
    %1824 = vmatpush1.msra.mxu0 0.0
    %1825 = vmatprep.subr.mxu0 0.0
    %1826 = vmatpush1.msra.mxu0 0.0
    %1827 = vmatprep.subr.mxu0 0.0
    %1828 = vmatpush1.msra.mxu0 0.0
    %1829 = vmatprep.subr.mxu0 0.0
    %1830 = vmatpush1.msra.mxu0 0.0
    %1831 = vmatprep.subr.mxu0 0.0
    %1832 = vmatpush1.msra.mxu0 0.0
    %1833 = vmatprep.subr.mxu0 0.0
    %1834 = vmatpush1.msra.mxu0 0.0
    %1835 = vmatprep.subr.mxu0 0.0
    %1836 = vmatpush1.msra.mxu0 0.0
    %1837 = vmatprep.subr.mxu0 0.0
    %1838 = vmatpush1.msra.mxu0 0.0
    %1839 = vmatprep.subr.mxu0 0.0
    %1840 = vmatpush1.msra.mxu0 0.0
    %1841 = vmatprep.subr.mxu0 0.0
    %1842 = vmatpush1.msra.mxu0 0.0
    %1843 = vmatprep.subr.mxu0 0.0
    %1844 = vmatpush1.msra.mxu0 0.0
    %1845 = vmatprep.subr.mxu0 0.0
    %1846 = vmatpush1.msra.mxu0 0.0
    %1847 = vmatprep.subr.mxu0 0.0
    %1848 = vmatpush1.msra.mxu0 0.0
    %1849 = vmatprep.mubr.f32.mxu0 0.0
    %1850 = vmatmul.mubr.f32.gmra.mrb[0].mxu0 %v1780
    %v1851 = vpop.f32.mrb[0].mxu0
    %v1852 = vadd.f32 %v1777, %v1851
    %v1853 = vpop.f32.mrb[0].mxu0
    %1854 = vmatprep.mubr.f32.mxu0 0.0
    %1855 = vmatmul.mubr.f32.gmra.mrb[0].mxu0 %v1783
    %v1856 = vpop.f32.mrb[0].mxu0
    %v1857 = vadd.f32 %v1777, %v1856
    %v1858 = vpop.f32.mrb[0].mxu0
    %1859 = vdwg.mxu0
    %1860 = vst.msk [vmem:[#allocation14] sm:$0xff] %vm145, %v1852
    %1861 = vst.msk [vmem:[#allocation14 + $0x8] sm:$0xff] %vm145, %v1857
    // Predicated region
    $region74: #{tpu_custom_call.1} parent=1 // pred_check
      _
    $region75: #{tpu_custom_call.1} parent=1 // pred_check_branch
      %1863 = sbr.rel (0) target = $region77
    $region76: #{tpu_custom_call.1} parent=1 // pred_region
      %s1865 = ssub.s32 256, 256
      %1866 = vsyncadd [#allocation4], %s1865
      %s1867 = sshll.u32 [#allocation14], 4
      %s1868 = int_to_ptr.vmem [resolvable:$true] %s1867
      %1873 = dma.vmem_to_hbm [thread:$0]  %s1868, 256, %s11, [#allocation4], 128, 128, 8
    $region77: #{tpu_custom_call.1} parent=1 // pred_fallthru
      _
    // Predicated region
    $region78: #{tpu_custom_call.1} parent=1 // pred_check
      _
    $region79: #{tpu_custom_call.1} parent=1 // pred_check_branch
      %1875 = sbr.rel (0) target = $region81
    $region80: #{tpu_custom_call.1} parent=1 // pred_region
      %1876 = dma.done [#allocation4], 256
    $region81: #{tpu_custom_call.1} parent=1 // pred_fallthru
      _
    %1877 = vsyncpa [#allocation3], 1
    %1878 = vsyncpa [#allocation6], 1
    %1879 = vsyncpa [#allocation9], 1
    %1880 = vsyncpa [#allocation12], 1
    %1881 = vsyncpa [#allocation4], 1

</llo_original>
